<compile_context>
chip_gen: v7x
topology: tpu7x:2x2x1
jax: 0.10.0
libtpu: 0.0.40
codegen_flags: <defaults>
</compile_context>

<pallas_src>
import functools

import numpy as np
import jax
import jax.numpy as jnp
from jax import lax
from jax.experimental import pallas as pl
from jax.experimental.pallas import tpu as pltpu


# ----------------------------------------------------------------------------
# Precompute (plain numpy glue -- mirrors RealSHT.__init__).
# ----------------------------------------------------------------------------
def clenshaw_curtiss_weights(n, a=-1.0, b=1.0):
    assert n > 1
    N = n - 1
    tj = np.pi * np.arange(n) / N
    x = np.cos(tj)                       # descending from +1 to -1 (equiangular)
    w = np.zeros(n, dtype=np.float64)
    for j in range(n):
        s = 0.0
        for k in range(1, N // 2 + 1):
            bk = 1.0 if (2 * k == N) else 2.0
            s += bk / (4.0 * k * k - 1.0) * np.cos(2.0 * k * j * np.pi / N)
        cj = 1.0 if (j == 0 or j == N) else 2.0
        w[j] = (cj / N) * (1.0 - s)
    x = 0.5 * (b - a) * x + 0.5 * (b + a)
    w = 0.5 * (b - a) * w
    return x, w


def _precompute_legpoly(mmax, lmax, t, norm="ortho", csphase=True):
    """Orthonormal associated Legendre P_l^m(cos t); returns (mmax, lmax, len(t))."""
    x = np.cos(t).astype(np.float64)
    nmax = max(mmax, lmax)
    vdm = np.zeros((nmax, nmax, len(x)), dtype=np.float64)
    vdm[0, 0, :] = 1.0 / np.sqrt(4.0 * np.pi)
    for l in range(1, nmax):
        vdm[l - 1, l, :] = np.sqrt(2 * l + 1) * x * vdm[l - 1, l - 1, :]
        vdm[l, l, :] = np.sqrt((2 * l + 1) * (1.0 + x) * (1.0 - x) / (2.0 * l)) * vdm[l - 1, l - 1, :]
    for l in range(2, nmax):
        for m in range(0, l - 1):
            a = np.sqrt((2 * l - 1) * (2 * l + 1) / ((l - m) * (l + m)))
            b = np.sqrt((l + m - 1) * (l - m - 1) * (2 * l + 1) /
                        ((l - m) * (l + m) * (2 * l - 3)))
            vdm[m, l, :] = x * a * vdm[m, l - 1, :] - b * vdm[m, l - 2, :]
    vdm = vdm[:mmax, :lmax]
    if csphase:
        for m in range(1, mmax, 2):
            vdm[m] *= -1.0
    return vdm


def precompute_sht_params(nlat, nlon, lmax=None, mmax=None, norm="ortho", csphase=True):
    cost, wq = clenshaw_curtiss_weights(nlat, -1.0, 1.0)
    lmax = lmax or nlat
    mmax = mmax or (nlon // 2 + 1)
    tq = np.flip(np.arccos(cost))
    pct = _precompute_legpoly(mmax, lmax, tq, norm=norm, csphase=csphase)   # (mmax, lmax, nlat)
    weights = np.einsum("mlk,k->mlk", pct, wq).astype(np.float32)           # buffer 'weights'
    return weights, lmax, mmax


def _round_up(x, m):
    return ((x + m - 1) // m) * m


def prepare_kernel_params(weights_mlk, nlon, *, block_m=8, lane=128, dtype=jnp.float32):
    """Build padded, kernel-friendly operands from the (mmax, lmax, nlat) weights.

    Returns:
      dft : (n_mtiles, 2*block_m, nlon)  fused real-DFT matrix, one tile per m-tile:
              rows [0, mt)    :  (2*pi/nlon) * cos(2*pi*m*n/nlon)   (real part)
              rows [mt, 2*mt) : -(2*pi/nlon) * sin(2*pi*m*n/nlon)   (imag part)
      w_t : (mmax_pad, nlat, lmax_pad)   Legendre*quadrature weights, transposed and
            zero-padded along m and l (lmax_pad is the lane-dense output dim).
    """
    mmax, lmax, nlat = weights_mlk.shape
    mt = block_m
    mmax_pad = _round_up(mmax, mt)
    lmax_pad = _round_up(lmax, lane)
    n_mtiles = mmax_pad // mt

    scale = 2.0 * np.pi / nlon
    nn = np.arange(nlon)
    dft = np.zeros((n_mtiles, 2 * mt, nlon), dtype=np.float64)
    for ti in range(n_mtiles):
        for r in range(mt):
            m = ti * mt + r
            if m < mmax:
                ang = 2.0 * np.pi * m * nn / nlon
                dft[ti, r, :] = scale * np.cos(ang)
                dft[ti, mt + r, :] = -scale * np.sin(ang)

    w_t = np.zeros((mmax_pad, nlat, lmax_pad), dtype=np.float64)
    w_t[:mmax, :, :lmax] = np.transpose(weights_mlk, (0, 2, 1))

    dft_j = jnp.asarray(dft, dtype=jnp.float32).astype(dtype)
    w_j = jnp.asarray(w_t, dtype=jnp.float32).astype(dtype)
    return dft_j, w_j


# ----------------------------------------------------------------------------
# Pallas kernel.  grid = (batch blocks, m tiles), m innermost; both axes parallel.
# ----------------------------------------------------------------------------
def _sht_kernel(x_ref, dft_ref, w_ref, o_ref, f_ref, *, nb, mt):
    """One (batch-block, m-tile) grid step.

    x_ref   : (nb, nlat, nlon)       input block (resident across the inner m axis)
    dft_ref : (1, 2*mt, nlon)        fused real-DFT rows for this m tile
    w_ref   : (mt, nlat, lmax_pad)   Legendre*quadrature weights for this m tile
    o_ref   : (mt, 2*nb, lmax_pad)   merged output block: rows [0,nb)=re, [nb,2nb)=im
    f_ref   : (2*nb*mt, nlat) VMEM   per-step Fourier scratch, row = i*mt + m_local
                                     with i = part*nb + b  (part 0 = real, 1 = imag)
    """
    d = dft_ref[0]                                            # (2*mt, nlon)

    # Phase 1: real DFT for this m tile (MXU), contiguous stores into the scratch.
    for b in range(nb):                                       # static unroll
        xb = x_ref[b]                                         # (nlat, nlon)
        if xb.dtype != d.dtype:
            xb = xb.astype(d.dtype)                           # bf16 path (f32 accum)
        fb = lax.dot_general(d, xb, (((1,), (1,)), ((), ())),
                             preferred_element_type=jnp.float32)   # (2*mt, nlat)
        f_ref[pl.ds(b * mt, mt), :] = fb[:mt]                 # real rows for batch b
        f_ref[pl.ds((nb + b) * mt, mt), :] = fb[mt:]          # imag rows for batch b

    # Phase 2: Legendre contraction per m (MXU).  LHS has 2*nb rows -- raise block_n
    # (nb) so 2*nb >= 128 (v5e) / >= 256 (v6e/v7x) where VMEM allows.
    for m_local in range(mt):                                 # static unroll (mt small)
        fm = f_ref[pl.ds(m_local, 2 * nb, stride=mt), :]      # (2*nb, nlat)
        w_m = w_ref[m_local]                                  # (nlat, lmax_pad)
        if fm.dtype != w_m.dtype:
            fm = fm.astype(w_m.dtype)
        o_ref[m_local] = jnp.dot(fm, w_m, preferred_element_type=jnp.float32)


def real_sht(x, dft, w_t, lmax, mmax, *, block_n=32, vmem_limit_bytes=None):
    """x: (..., nlat, nlon) float32 -> (..., lmax, mmax) complex64."""
    *lead, nlat, nlon = x.shape
    N = int(np.prod(lead)) if lead else 1

    n_mtiles, two_mt, nlon_d = dft.shape
    assert nlon_d == nlon
    mt = two_mt // 2
    mmax_pad = n_mtiles * mt
    lmax_pad = w_t.shape[-1]

    # Batch block: multiple of 4 so the output block's sublane dim (2*nb) is aligned.
    nb = min(block_n, _round_up(N, 4))
    nb = max(4, _round_up(nb, 4))
    n_pad = _round_up(N, nb)
    nblocks = n_pad // nb

    xr = x.reshape(N, nlat, nlon)                      # free collapse; no HBM transpose
    if n_pad != N:
        xr = jnp.pad(xr, ((0, n_pad - N), (0, 0), (0, 0)))   # zero-pad: no garbage rows

    kernel = functools.partial(_sht_kernel, nb=nb, mt=mt)

    cp = dict(dimension_semantics=("parallel", "parallel"))   # no cross-step state left
    if vmem_limit_bytes is not None:
        cp["vmem_limit_bytes"] = vmem_limit_bytes

    out_full = pl.pallas_call(
        kernel,
        out_shape=jax.ShapeDtypeStruct((mmax_pad, 2 * n_pad, lmax_pad), jnp.float32),
        grid=(nblocks, n_mtiles),                             # batch outer, m innermost
        in_specs=[
            pl.BlockSpec((nb, nlat, nlon), lambda bi, mi: (bi, 0, 0)),      # x block
            pl.BlockSpec((1, 2 * mt, nlon), lambda bi, mi: (mi, 0, 0)),     # DFT tile
            pl.BlockSpec((mt, nlat, lmax_pad), lambda bi, mi: (mi, 0, 0)),  # W tile
        ],
        out_specs=pl.BlockSpec((mt, 2 * nb, lmax_pad), lambda bi, mi: (mi, bi, 0)),
        scratch_shapes=[pltpu.VMEM((2 * nb * mt, nlat), jnp.float32)],
        compiler_params=pltpu.CompilerParams(**cp),
    )(xr, dft, w_t)

    # Split merged real/imag rows, strip m / l / batch padding, go to (..., lmax, mmax).
    out5 = out_full.reshape(mmax_pad, nblocks, 2, nb, lmax_pad)
    ore = out5[:, :, 0].reshape(mmax_pad, n_pad, lmax_pad)
    oim = out5[:, :, 1].reshape(mmax_pad, n_pad, lmax_pad)
    out = (ore + 1j * oim)[:mmax, :N, :lmax]                  # (mmax, N, lmax) complex64
    out = jnp.transpose(out, (1, 2, 0))                       # (N, lmax, mmax)
    return out.reshape(*lead, lmax, mmax)


# ----------------------------------------------------------------------------
# Pure-JAX reference (FFT-based), used only to validate the Pallas result.
# ----------------------------------------------------------------------------
def real_sht_ref(x, weights_mlk):
    mmax = weights_mlk.shape[0]
    xc = 2.0 * jnp.pi * jnp.fft.rfft(x, axis=-1, norm="forward")
    xr = jnp.real(xc)[..., :mmax]
    xi = jnp.imag(xc)[..., :mmax]
    out_re = jnp.einsum("...km,mlk->...lm", xr, weights_mlk)
    out_im = jnp.einsum("...km,mlk->...lm", xi, weights_mlk)
    return out_re + 1j * out_im


if __name__ == "__main__":
    B, C, nlat, nlon = 2, 4, 16, 16
    weights_np, lmax, mmax = precompute_sht_params(nlat, nlon)      # (mmax, lmax, nlat)

    key = jax.random.PRNGKey(0)
    x = jax.random.normal(key, (B, C, nlat, nlon), dtype=jnp.float32)
    ref = jax.block_until_ready(real_sht_ref(x, jnp.asarray(weights_np)))

    # float32 operands (bit-faithful to the torch_harmonics semantics).
    dft, w_t = prepare_kernel_params(weights_np, nlon, block_m=8, lane=128)
    out = jax.block_until_ready(real_sht(x, dft, w_t, lmax, mmax, block_n=32))
    assert out.shape == (B, C, lmax, mmax), out.shape
    assert out.dtype == jnp.complex64, out.dtype
    np.testing.assert_allclose(np.asarray(out), np.asarray(ref), rtol=1e-4, atol=1e-4)

    # bf16 operands, f32 accumulation (MXU-native rate; halves the weights HBM stream).
    dft_bf, w_bf = prepare_kernel_params(weights_np, nlon, block_m=8, lane=128,
                                         dtype=jnp.bfloat16)
    out_bf = jax.block_until_ready(real_sht(x, dft_bf, w_bf, lmax, mmax, block_n=32))
    np.testing.assert_allclose(np.asarray(out_bf), np.asarray(ref), rtol=1e-1, atol=1e-1)

    print("KERNEL_OK")
</pallas_src>

<mosaic_0001>
module attributes {stable_mosaic.version = 11 : i64} {
  func.func @_sht_kernel(%arg0: i32, %arg1: i32, %arg2: memref<8x16x16xf32, #tpu.memory_space<vmem>>, %arg3: memref<1x16x16xf32, #tpu.memory_space<vmem>>, %arg4: memref<8x16x128xf32, #tpu.memory_space<vmem>>, %arg5: memref<8x16x128xf32, #tpu.memory_space<vmem>>, %arg6: memref<128x16xf32, #tpu.memory_space<vmem>>) attributes {dimension_semantics = [#tpu.dimension_semantics<parallel>, #tpu.dimension_semantics<parallel>], iteration_bounds = array<i64: 1, 2>, scalar_prefetch = 0 : i64, scratch_operands = 1 : i64, tpu.core_type = #tpu.core_type<tc>, window_params = [{transform_indices = @transform_0, window_bounds = array<i64: 8, 16, 16>}, {transform_indices = @transform_1, window_bounds = array<i64: 1, 16, 16>}, {transform_indices = @transform_2, window_bounds = array<i64: 8, 16, 128>}, {transform_indices = @transform_3, window_bounds = array<i64: 8, 16, 128>}]} {
    %c0 = arith.constant 0 : index
    %c0_0 = arith.constant 0 : index
    %c0_1 = arith.constant 0 : index
    %0 = vector.load %arg3[%c0, %c0_0, %c0_1] : memref<1x16x16xf32, #tpu.memory_space<vmem>>, vector<1x16x16xf32>
    %1 = vector.shape_cast %0 : vector<1x16x16xf32> to vector<16x16xf32>
    %c0_2 = arith.constant 0 : index
    %c0_3 = arith.constant 0 : index
    %c0_4 = arith.constant 0 : index
    %2 = vector.load %arg2[%c0_2, %c0_3, %c0_4] : memref<8x16x16xf32, #tpu.memory_space<vmem>>, vector<1x16x16xf32>
    %3 = vector.shape_cast %2 : vector<1x16x16xf32> to vector<16x16xf32>
    %cst = arith.constant dense<0.000000e+00> : vector<16x16xf32>
    %4 = tpu.matmul %1, %3, %cst {dimension_numbers = #tpu.dot_dimension_numbers<[1], [1], [0], [0], [0, 0, 1, 0], [], []>} : vector<16x16xf32>, vector<16x16xf32>, vector<16x16xf32> -> vector<16x16xf32>
    %5 = vector.extract_strided_slice %4 {offsets = [0, 0], sizes = [8, 16], strides = [1, 1]} : vector<16x16xf32> to vector<8x16xf32>
    %c0_5 = arith.constant 0 : index
    %c0_6 = arith.constant 0 : index
    %6 = vector.load %arg6[%c0_5, %c0_6] : memref<128x16xf32, #tpu.memory_space<vmem>>, vector<8x16xf32>
    tpu.vector_store %arg6[%c0_5, %c0_6], %5 {strides = array<i32>} : memref<128x16xf32, #tpu.memory_space<vmem>>, vector<8x16xf32>,
    %7 = vector.extract_strided_slice %4 {offsets = [8, 0], sizes = [8, 16], strides = [1, 1]} : vector<16x16xf32> to vector<8x16xf32>
    %c64 = arith.constant 64 : index
    %c0_7 = arith.constant 0 : index
    %8 = vector.load %arg6[%c64, %c0_7] : memref<128x16xf32, #tpu.memory_space<vmem>>, vector<8x16xf32>
    tpu.vector_store %arg6[%c64, %c0_7], %7 {strides = array<i32>} : memref<128x16xf32, #tpu.memory_space<vmem>>, vector<8x16xf32>,
    %c1 = arith.constant 1 : index
    %c0_8 = arith.constant 0 : index
    %c0_9 = arith.constant 0 : index
    %9 = vector.load %arg2[%c1, %c0_8, %c0_9] : memref<8x16x16xf32, #tpu.memory_space<vmem>>, vector<1x16x16xf32>
    %10 = vector.shape_cast %9 : vector<1x16x16xf32> to vector<16x16xf32>
    %cst_10 = arith.constant dense<0.000000e+00> : vector<16x16xf32>
    %11 = tpu.matmul %1, %10, %cst_10 {dimension_numbers = #tpu.dot_dimension_numbers<[1], [1], [0], [0], [0, 0, 1, 0], [], []>} : vector<16x16xf32>, vector<16x16xf32>, vector<16x16xf32> -> vector<16x16xf32>
    %12 = vector.extract_strided_slice %11 {offsets = [0, 0], sizes = [8, 16], strides = [1, 1]} : vector<16x16xf32> to vector<8x16xf32>
    %c8 = arith.constant 8 : index
    %c0_11 = arith.constant 0 : index
    %13 = vector.load %arg6[%c8, %c0_11] : memref<128x16xf32, #tpu.memory_space<vmem>>, vector<8x16xf32>
    tpu.vector_store %arg6[%c8, %c0_11], %12 {strides = array<i32>} : memref<128x16xf32, #tpu.memory_space<vmem>>, vector<8x16xf32>,
    %14 = vector.extract_strided_slice %11 {offsets = [8, 0], sizes = [8, 16], strides = [1, 1]} : vector<16x16xf32> to vector<8x16xf32>
    %c72 = arith.constant 72 : index
    %c0_12 = arith.constant 0 : index
    %15 = vector.load %arg6[%c72, %c0_12] : memref<128x16xf32, #tpu.memory_space<vmem>>, vector<8x16xf32>
    tpu.vector_store %arg6[%c72, %c0_12], %14 {strides = array<i32>} : memref<128x16xf32, #tpu.memory_space<vmem>>, vector<8x16xf32>,
    %c2 = arith.constant 2 : index
    %c0_13 = arith.constant 0 : index
    %c0_14 = arith.constant 0 : index
    %16 = vector.load %arg2[%c2, %c0_13, %c0_14] : memref<8x16x16xf32, #tpu.memory_space<vmem>>, vector<1x16x16xf32>
    %17 = vector.shape_cast %16 : vector<1x16x16xf32> to vector<16x16xf32>
    %cst_15 = arith.constant dense<0.000000e+00> : vector<16x16xf32>
    %18 = tpu.matmul %1, %17, %cst_15 {dimension_numbers = #tpu.dot_dimension_numbers<[1], [1], [0], [0], [0, 0, 1, 0], [], []>} : vector<16x16xf32>, vector<16x16xf32>, vector<16x16xf32> -> vector<16x16xf32>
    %19 = vector.extract_strided_slice %18 {offsets = [0, 0], sizes = [8, 16], strides = [1, 1]} : vector<16x16xf32> to vector<8x16xf32>
    %c16 = arith.constant 16 : index
    %c0_16 = arith.constant 0 : index
    %20 = vector.load %arg6[%c16, %c0_16] : memref<128x16xf32, #tpu.memory_space<vmem>>, vector<8x16xf32>
    tpu.vector_store %arg6[%c16, %c0_16], %19 {strides = array<i32>} : memref<128x16xf32, #tpu.memory_space<vmem>>, vector<8x16xf32>,
    %21 = vector.extract_strided_slice %18 {offsets = [8, 0], sizes = [8, 16], strides = [1, 1]} : vector<16x16xf32> to vector<8x16xf32>
    %c80 = arith.constant 80 : index
    %c0_17 = arith.constant 0 : index
    %22 = vector.load %arg6[%c80, %c0_17] : memref<128x16xf32, #tpu.memory_space<vmem>>, vector<8x16xf32>
    tpu.vector_store %arg6[%c80, %c0_17], %21 {strides = array<i32>} : memref<128x16xf32, #tpu.memory_space<vmem>>, vector<8x16xf32>,
    %c3 = arith.constant 3 : index
    %c0_18 = arith.constant 0 : index
    %c0_19 = arith.constant 0 : index
    %23 = vector.load %arg2[%c3, %c0_18, %c0_19] : memref<8x16x16xf32, #tpu.memory_space<vmem>>, vector<1x16x16xf32>
    %24 = vector.shape_cast %23 : vector<1x16x16xf32> to vector<16x16xf32>
    %cst_20 = arith.constant dense<0.000000e+00> : vector<16x16xf32>
    %25 = tpu.matmul %1, %24, %cst_20 {dimension_numbers = #tpu.dot_dimension_numbers<[1], [1], [0], [0], [0, 0, 1, 0], [], []>} : vector<16x16xf32>, vector<16x16xf32>, vector<16x16xf32> -> vector<16x16xf32>
    %26 = vector.extract_strided_slice %25 {offsets = [0, 0], sizes = [8, 16], strides = [1, 1]} : vector<16x16xf32> to vector<8x16xf32>
    %c24 = arith.constant 24 : index
    %c0_21 = arith.constant 0 : index
    %27 = vector.load %arg6[%c24, %c0_21] : memref<128x16xf32, #tpu.memory_space<vmem>>, vector<8x16xf32>
    tpu.vector_store %arg6[%c24, %c0_21], %26 {strides = array<i32>} : memref<128x16xf32, #tpu.memory_space<vmem>>, vector<8x16xf32>,
    %28 = vector.extract_strided_slice %25 {offsets = [8, 0], sizes = [8, 16], strides = [1, 1]} : vector<16x16xf32> to vector<8x16xf32>
    %c88 = arith.constant 88 : index
    %c0_22 = arith.constant 0 : index
    %29 = vector.load %arg6[%c88, %c0_22] : memref<128x16xf32, #tpu.memory_space<vmem>>, vector<8x16xf32>
    tpu.vector_store %arg6[%c88, %c0_22], %28 {strides = array<i32>} : memref<128x16xf32, #tpu.memory_space<vmem>>, vector<8x16xf32>,
    %c4 = arith.constant 4 : index
    %c0_23 = arith.constant 0 : index
    %c0_24 = arith.constant 0 : index
    %30 = vector.load %arg2[%c4, %c0_23, %c0_24] : memref<8x16x16xf32, #tpu.memory_space<vmem>>, vector<1x16x16xf32>
    %31 = vector.shape_cast %30 : vector<1x16x16xf32> to vector<16x16xf32>
    %cst_25 = arith.constant dense<0.000000e+00> : vector<16x16xf32>
    %32 = tpu.matmul %1, %31, %cst_25 {dimension_numbers = #tpu.dot_dimension_numbers<[1], [1], [0], [0], [0, 0, 1, 0], [], []>} : vector<16x16xf32>, vector<16x16xf32>, vector<16x16xf32> -> vector<16x16xf32>
    %33 = vector.extract_strided_slice %32 {offsets = [0, 0], sizes = [8, 16], strides = [1, 1]} : vector<16x16xf32> to vector<8x16xf32>
    %c32 = arith.constant 32 : index
    %c0_26 = arith.constant 0 : index
    %34 = vector.load %arg6[%c32, %c0_26] : memref<128x16xf32, #tpu.memory_space<vmem>>, vector<8x16xf32>
    tpu.vector_store %arg6[%c32, %c0_26], %33 {strides = array<i32>} : memref<128x16xf32, #tpu.memory_space<vmem>>, vector<8x16xf32>,
    %35 = vector.extract_strided_slice %32 {offsets = [8, 0], sizes = [8, 16], strides = [1, 1]} : vector<16x16xf32> to vector<8x16xf32>
    %c96 = arith.constant 96 : index
    %c0_27 = arith.constant 0 : index
    %36 = vector.load %arg6[%c96, %c0_27] : memref<128x16xf32, #tpu.memory_space<vmem>>, vector<8x16xf32>
    tpu.vector_store %arg6[%c96, %c0_27], %35 {strides = array<i32>} : memref<128x16xf32, #tpu.memory_space<vmem>>, vector<8x16xf32>,
    %c5 = arith.constant 5 : index
    %c0_28 = arith.constant 0 : index
    %c0_29 = arith.constant 0 : index
    %37 = vector.load %arg2[%c5, %c0_28, %c0_29] : memref<8x16x16xf32, #tpu.memory_space<vmem>>, vector<1x16x16xf32>
    %38 = vector.shape_cast %37 : vector<1x16x16xf32> to vector<16x16xf32>
    %cst_30 = arith.constant dense<0.000000e+00> : vector<16x16xf32>
    %39 = tpu.matmul %1, %38, %cst_30 {dimension_numbers = #tpu.dot_dimension_numbers<[1], [1], [0], [0], [0, 0, 1, 0], [], []>} : vector<16x16xf32>, vector<16x16xf32>, vector<16x16xf32> -> vector<16x16xf32>
    %40 = vector.extract_strided_slice %39 {offsets = [0, 0], sizes = [8, 16], strides = [1, 1]} : vector<16x16xf32> to vector<8x16xf32>
    %c40 = arith.constant 40 : index
    %c0_31 = arith.constant 0 : index
    %41 = vector.load %arg6[%c40, %c0_31] : memref<128x16xf32, #tpu.memory_space<vmem>>, vector<8x16xf32>
    tpu.vector_store %arg6[%c40, %c0_31], %40 {strides = array<i32>} : memref<128x16xf32, #tpu.memory_space<vmem>>, vector<8x16xf32>,
    %42 = vector.extract_strided_slice %39 {offsets = [8, 0], sizes = [8, 16], strides = [1, 1]} : vector<16x16xf32> to vector<8x16xf32>
    %c104 = arith.constant 104 : index
    %c0_32 = arith.constant 0 : index
    %43 = vector.load %arg6[%c104, %c0_32] : memref<128x16xf32, #tpu.memory_space<vmem>>, vector<8x16xf32>
    tpu.vector_store %arg6[%c104, %c0_32], %42 {strides = array<i32>} : memref<128x16xf32, #tpu.memory_space<vmem>>, vector<8x16xf32>,
    %c6 = arith.constant 6 : index
    %c0_33 = arith.constant 0 : index
    %c0_34 = arith.constant 0 : index
    %44 = vector.load %arg2[%c6, %c0_33, %c0_34] : memref<8x16x16xf32, #tpu.memory_space<vmem>>, vector<1x16x16xf32>
    %45 = vector.shape_cast %44 : vector<1x16x16xf32> to vector<16x16xf32>
    %cst_35 = arith.constant dense<0.000000e+00> : vector<16x16xf32>
    %46 = tpu.matmul %1, %45, %cst_35 {dimension_numbers = #tpu.dot_dimension_numbers<[1], [1], [0], [0], [0, 0, 1, 0], [], []>} : vector<16x16xf32>, vector<16x16xf32>, vector<16x16xf32> -> vector<16x16xf32>
    %47 = vector.extract_strided_slice %46 {offsets = [0, 0], sizes = [8, 16], strides = [1, 1]} : vector<16x16xf32> to vector<8x16xf32>
    %c48 = arith.constant 48 : index
    %c0_36 = arith.constant 0 : index
    %48 = vector.load %arg6[%c48, %c0_36] : memref<128x16xf32, #tpu.memory_space<vmem>>, vector<8x16xf32>
    tpu.vector_store %arg6[%c48, %c0_36], %47 {strides = array<i32>} : memref<128x16xf32, #tpu.memory_space<vmem>>, vector<8x16xf32>,
    %49 = vector.extract_strided_slice %46 {offsets = [8, 0], sizes = [8, 16], strides = [1, 1]} : vector<16x16xf32> to vector<8x16xf32>
    %c112 = arith.constant 112 : index
    %c0_37 = arith.constant 0 : index
    %50 = vector.load %arg6[%c112, %c0_37] : memref<128x16xf32, #tpu.memory_space<vmem>>, vector<8x16xf32>
    tpu.vector_store %arg6[%c112, %c0_37], %49 {strides = array<i32>} : memref<128x16xf32, #tpu.memory_space<vmem>>, vector<8x16xf32>,
    %c7 = arith.constant 7 : index
    %c0_38 = arith.constant 0 : index
    %c0_39 = arith.constant 0 : index
    %51 = vector.load %arg2[%c7, %c0_38, %c0_39] : memref<8x16x16xf32, #tpu.memory_space<vmem>>, vector<1x16x16xf32>
    %52 = vector.shape_cast %51 : vector<1x16x16xf32> to vector<16x16xf32>
    %cst_40 = arith.constant dense<0.000000e+00> : vector<16x16xf32>
    %53 = tpu.matmul %1, %52, %cst_40 {dimension_numbers = #tpu.dot_dimension_numbers<[1], [1], [0], [0], [0, 0, 1, 0], [], []>} : vector<16x16xf32>, vector<16x16xf32>, vector<16x16xf32> -> vector<16x16xf32>
    %54 = vector.extract_strided_slice %53 {offsets = [0, 0], sizes = [8, 16], strides = [1, 1]} : vector<16x16xf32> to vector<8x16xf32>
    %c56 = arith.constant 56 : index
    %c0_41 = arith.constant 0 : index
    %55 = vector.load %arg6[%c56, %c0_41] : memref<128x16xf32, #tpu.memory_space<vmem>>, vector<8x16xf32>
    tpu.vector_store %arg6[%c56, %c0_41], %54 {strides = array<i32>} : memref<128x16xf32, #tpu.memory_space<vmem>>, vector<8x16xf32>,
    %56 = vector.extract_strided_slice %53 {offsets = [8, 0], sizes = [8, 16], strides = [1, 1]} : vector<16x16xf32> to vector<8x16xf32>
    %c120 = arith.constant 120 : index
    %c0_42 = arith.constant 0 : index
    %57 = vector.load %arg6[%c120, %c0_42] : memref<128x16xf32, #tpu.memory_space<vmem>>, vector<8x16xf32>
    tpu.vector_store %arg6[%c120, %c0_42], %56 {strides = array<i32>} : memref<128x16xf32, #tpu.memory_space<vmem>>, vector<8x16xf32>,
    %c0_43 = arith.constant 0 : index
    %c0_44 = arith.constant 0 : index
    %58 = tpu.strided_load %arg6[%c0_43, %c0_44] {strides = array<i32: 8, 1>} : memref<128x16xf32, #tpu.memory_space<vmem>>, vector<16x16xf32>
    %c0_45 = arith.constant 0 : index
    %c0_46 = arith.constant 0 : index
    %c0_47 = arith.constant 0 : index
    %59 = vector.load %arg4[%c0_45, %c0_46, %c0_47] : memref<8x16x128xf32, #tpu.memory_space<vmem>>, vector<1x16x128xf32>
    %60 = vector.shape_cast %59 : vector<1x16x128xf32> to vector<16x128xf32>
    %cst_48 = arith.constant dense<0.000000e+00> : vector<16x128xf32>
    %61 = tpu.matmul %58, %60, %cst_48 {dimension_numbers = #tpu.dot_dimension_numbers<[1], [0], [0], [1], [0, 0, 1, 1], [], []>} : vector<16x16xf32>, vector<16x128xf32>, vector<16x128xf32> -> vector<16x128xf32>
    %c0_49 = arith.constant 0 : index
    %c0_50 = arith.constant 0 : index
    %c0_51 = arith.constant 0 : index
    %62 = vector.load %arg5[%c0_49, %c0_50, %c0_51] : memref<8x16x128xf32, #tpu.memory_space<vmem>>, vector<1x16x128xf32>
    %63 = vector.shape_cast %62 : vector<1x16x128xf32> to vector<16x128xf32>
    %64 = vector.shape_cast %61 : vector<16x128xf32> to vector<1x16x128xf32>
    tpu.vector_store %arg5[%c0_49, %c0_50, %c0_51], %64 {strides = array<i32>} : memref<8x16x128xf32, #tpu.memory_space<vmem>>, vector<1x16x128xf32>,
    %c1_52 = arith.constant 1 : index
    %c0_53 = arith.constant 0 : index
    %65 = tpu.strided_load %arg6[%c1_52, %c0_53] {strides = array<i32: 8, 1>} : memref<128x16xf32, #tpu.memory_space<vmem>>, vector<16x16xf32>
    %c1_54 = arith.constant 1 : index
    %c0_55 = arith.constant 0 : index
    %c0_56 = arith.constant 0 : index
    %66 = vector.load %arg4[%c1_54, %c0_55, %c0_56] : memref<8x16x128xf32, #tpu.memory_space<vmem>>, vector<1x16x128xf32>
    %67 = vector.shape_cast %66 : vector<1x16x128xf32> to vector<16x128xf32>
    %cst_57 = arith.constant dense<0.000000e+00> : vector<16x128xf32>
    %68 = tpu.matmul %65, %67, %cst_57 {dimension_numbers = #tpu.dot_dimension_numbers<[1], [0], [0], [1], [0, 0, 1, 1], [], []>} : vector<16x16xf32>, vector<16x128xf32>, vector<16x128xf32> -> vector<16x128xf32>
    %c1_58 = arith.constant 1 : index
    %c0_59 = arith.constant 0 : index
    %c0_60 = arith.constant 0 : index
    %69 = vector.load %arg5[%c1_58, %c0_59, %c0_60] : memref<8x16x128xf32, #tpu.memory_space<vmem>>, vector<1x16x128xf32>
    %70 = vector.shape_cast %69 : vector<1x16x128xf32> to vector<16x128xf32>
    %71 = vector.shape_cast %68 : vector<16x128xf32> to vector<1x16x128xf32>
    tpu.vector_store %arg5[%c1_58, %c0_59, %c0_60], %71 {strides = array<i32>} : memref<8x16x128xf32, #tpu.memory_space<vmem>>, vector<1x16x128xf32>,
    %c2_61 = arith.constant 2 : index
    %c0_62 = arith.constant 0 : index
    %72 = tpu.strided_load %arg6[%c2_61, %c0_62] {strides = array<i32: 8, 1>} : memref<128x16xf32, #tpu.memory_space<vmem>>, vector<16x16xf32>
    %c2_63 = arith.constant 2 : index
    %c0_64 = arith.constant 0 : index
    %c0_65 = arith.constant 0 : index
    %73 = vector.load %arg4[%c2_63, %c0_64, %c0_65] : memref<8x16x128xf32, #tpu.memory_space<vmem>>, vector<1x16x128xf32>
    %74 = vector.shape_cast %73 : vector<1x16x128xf32> to vector<16x128xf32>
    %cst_66 = arith.constant dense<0.000000e+00> : vector<16x128xf32>
    %75 = tpu.matmul %72, %74, %cst_66 {dimension_numbers = #tpu.dot_dimension_numbers<[1], [0], [0], [1], [0, 0, 1, 1], [], []>} : vector<16x16xf32>, vector<16x128xf32>, vector<16x128xf32> -> vector<16x128xf32>
    %c2_67 = arith.constant 2 : index
    %c0_68 = arith.constant 0 : index
    %c0_69 = arith.constant 0 : index
    %76 = vector.load %arg5[%c2_67, %c0_68, %c0_69] : memref<8x16x128xf32, #tpu.memory_space<vmem>>, vector<1x16x128xf32>
    %77 = vector.shape_cast %76 : vector<1x16x128xf32> to vector<16x128xf32>
    %78 = vector.shape_cast %75 : vector<16x128xf32> to vector<1x16x128xf32>
    tpu.vector_store %arg5[%c2_67, %c0_68, %c0_69], %78 {strides = array<i32>} : memref<8x16x128xf32, #tpu.memory_space<vmem>>, vector<1x16x128xf32>,
    %c3_70 = arith.constant 3 : index
    %c0_71 = arith.constant 0 : index
    %79 = tpu.strided_load %arg6[%c3_70, %c0_71] {strides = array<i32: 8, 1>} : memref<128x16xf32, #tpu.memory_space<vmem>>, vector<16x16xf32>
    %c3_72 = arith.constant 3 : index
    %c0_73 = arith.constant 0 : index
    %c0_74 = arith.constant 0 : index
    %80 = vector.load %arg4[%c3_72, %c0_73, %c0_74] : memref<8x16x128xf32, #tpu.memory_space<vmem>>, vector<1x16x128xf32>
    %81 = vector.shape_cast %80 : vector<1x16x128xf32> to vector<16x128xf32>
    %cst_75 = arith.constant dense<0.000000e+00> : vector<16x128xf32>
    %82 = tpu.matmul %79, %81, %cst_75 {dimension_numbers = #tpu.dot_dimension_numbers<[1], [0], [0], [1], [0, 0, 1, 1], [], []>} : vector<16x16xf32>, vector<16x128xf32>, vector<16x128xf32> -> vector<16x128xf32>
    %c3_76 = arith.constant 3 : index
    %c0_77 = arith.constant 0 : index
    %c0_78 = arith.constant 0 : index
    %83 = vector.load %arg5[%c3_76, %c0_77, %c0_78] : memref<8x16x128xf32, #tpu.memory_space<vmem>>, vector<1x16x128xf32>
    %84 = vector.shape_cast %83 : vector<1x16x128xf32> to vector<16x128xf32>
    %85 = vector.shape_cast %82 : vector<16x128xf32> to vector<1x16x128xf32>
    tpu.vector_store %arg5[%c3_76, %c0_77, %c0_78], %85 {strides = array<i32>} : memref<8x16x128xf32, #tpu.memory_space<vmem>>, vector<1x16x128xf32>,
    %c4_79 = arith.constant 4 : index
    %c0_80 = arith.constant 0 : index
    %86 = tpu.strided_load %arg6[%c4_79, %c0_80] {strides = array<i32: 8, 1>} : memref<128x16xf32, #tpu.memory_space<vmem>>, vector<16x16xf32>
    %c4_81 = arith.constant 4 : index
    %c0_82 = arith.constant 0 : index
    %c0_83 = arith.constant 0 : index
    %87 = vector.load %arg4[%c4_81, %c0_82, %c0_83] : memref<8x16x128xf32, #tpu.memory_space<vmem>>, vector<1x16x128xf32>
    %88 = vector.shape_cast %87 : vector<1x16x128xf32> to vector<16x128xf32>
    %cst_84 = arith.constant dense<0.000000e+00> : vector<16x128xf32>
    %89 = tpu.matmul %86, %88, %cst_84 {dimension_numbers = #tpu.dot_dimension_numbers<[1], [0], [0], [1], [0, 0, 1, 1], [], []>} : vector<16x16xf32>, vector<16x128xf32>, vector<16x128xf32> -> vector<16x128xf32>
    %c4_85 = arith.constant 4 : index
    %c0_86 = arith.constant 0 : index
    %c0_87 = arith.constant 0 : index
    %90 = vector.load %arg5[%c4_85, %c0_86, %c0_87] : memref<8x16x128xf32, #tpu.memory_space<vmem>>, vector<1x16x128xf32>
    %91 = vector.shape_cast %90 : vector<1x16x128xf32> to vector<16x128xf32>
    %92 = vector.shape_cast %89 : vector<16x128xf32> to vector<1x16x128xf32>
    tpu.vector_store %arg5[%c4_85, %c0_86, %c0_87], %92 {strides = array<i32>} : memref<8x16x128xf32, #tpu.memory_space<vmem>>, vector<1x16x128xf32>,
    %c5_88 = arith.constant 5 : index
    %c0_89 = arith.constant 0 : index
    %93 = tpu.strided_load %arg6[%c5_88, %c0_89] {strides = array<i32: 8, 1>} : memref<128x16xf32, #tpu.memory_space<vmem>>, vector<16x16xf32>
    %c5_90 = arith.constant 5 : index
    %c0_91 = arith.constant 0 : index
    %c0_92 = arith.constant 0 : index
    %94 = vector.load %arg4[%c5_90, %c0_91, %c0_92] : memref<8x16x128xf32, #tpu.memory_space<vmem>>, vector<1x16x128xf32>
    %95 = vector.shape_cast %94 : vector<1x16x128xf32> to vector<16x128xf32>
    %cst_93 = arith.constant dense<0.000000e+00> : vector<16x128xf32>
    %96 = tpu.matmul %93, %95, %cst_93 {dimension_numbers = #tpu.dot_dimension_numbers<[1], [0], [0], [1], [0, 0, 1, 1], [], []>} : vector<16x16xf32>, vector<16x128xf32>, vector<16x128xf32> -> vector<16x128xf32>
    %c5_94 = arith.constant 5 : index
    %c0_95 = arith.constant 0 : index
    %c0_96 = arith.constant 0 : index
    %97 = vector.load %arg5[%c5_94, %c0_95, %c0_96] : memref<8x16x128xf32, #tpu.memory_space<vmem>>, vector<1x16x128xf32>
    %98 = vector.shape_cast %97 : vector<1x16x128xf32> to vector<16x128xf32>
    %99 = vector.shape_cast %96 : vector<16x128xf32> to vector<1x16x128xf32>
    tpu.vector_store %arg5[%c5_94, %c0_95, %c0_96], %99 {strides = array<i32>} : memref<8x16x128xf32, #tpu.memory_space<vmem>>, vector<1x16x128xf32>,
    %c6_97 = arith.constant 6 : index
    %c0_98 = arith.constant 0 : index
    %100 = tpu.strided_load %arg6[%c6_97, %c0_98] {strides = array<i32: 8, 1>} : memref<128x16xf32, #tpu.memory_space<vmem>>, vector<16x16xf32>
    %c6_99 = arith.constant 6 : index
    %c0_100 = arith.constant 0 : index
    %c0_101 = arith.constant 0 : index
    %101 = vector.load %arg4[%c6_99, %c0_100, %c0_101] : memref<8x16x128xf32, #tpu.memory_space<vmem>>, vector<1x16x128xf32>
    %102 = vector.shape_cast %101 : vector<1x16x128xf32> to vector<16x128xf32>
    %cst_102 = arith.constant dense<0.000000e+00> : vector<16x128xf32>
    %103 = tpu.matmul %100, %102, %cst_102 {dimension_numbers = #tpu.dot_dimension_numbers<[1], [0], [0], [1], [0, 0, 1, 1], [], []>} : vector<16x16xf32>, vector<16x128xf32>, vector<16x128xf32> -> vector<16x128xf32>
    %c6_103 = arith.constant 6 : index
    %c0_104 = arith.constant 0 : index
    %c0_105 = arith.constant 0 : index
    %104 = vector.load %arg5[%c6_103, %c0_104, %c0_105] : memref<8x16x128xf32, #tpu.memory_space<vmem>>, vector<1x16x128xf32>
    %105 = vector.shape_cast %104 : vector<1x16x128xf32> to vector<16x128xf32>
    %106 = vector.shape_cast %103 : vector<16x128xf32> to vector<1x16x128xf32>
    tpu.vector_store %arg5[%c6_103, %c0_104, %c0_105], %106 {strides = array<i32>} : memref<8x16x128xf32, #tpu.memory_space<vmem>>, vector<1x16x128xf32>,
    %c7_106 = arith.constant 7 : index
    %c0_107 = arith.constant 0 : index
    %107 = tpu.strided_load %arg6[%c7_106, %c0_107] {strides = array<i32: 8, 1>} : memref<128x16xf32, #tpu.memory_space<vmem>>, vector<16x16xf32>
    %c7_108 = arith.constant 7 : index
    %c0_109 = arith.constant 0 : index
    %c0_110 = arith.constant 0 : index
    %108 = vector.load %arg4[%c7_108, %c0_109, %c0_110] : memref<8x16x128xf32, #tpu.memory_space<vmem>>, vector<1x16x128xf32>
    %109 = vector.shape_cast %108 : vector<1x16x128xf32> to vector<16x128xf32>
    %cst_111 = arith.constant dense<0.000000e+00> : vector<16x128xf32>
    %110 = tpu.matmul %107, %109, %cst_111 {dimension_numbers = #tpu.dot_dimension_numbers<[1], [0], [0], [1], [0, 0, 1, 1], [], []>} : vector<16x16xf32>, vector<16x128xf32>, vector<16x128xf32> -> vector<16x128xf32>
    %c7_112 = arith.constant 7 : index
    %c0_113 = arith.constant 0 : index
    %c0_114 = arith.constant 0 : index
    %111 = vector.load %arg5[%c7_112, %c0_113, %c0_114] : memref<8x16x128xf32, #tpu.memory_space<vmem>>, vector<1x16x128xf32>
    %112 = vector.shape_cast %111 : vector<1x16x128xf32> to vector<16x128xf32>
    %113 = vector.shape_cast %110 : vector<16x128xf32> to vector<1x16x128xf32>
    tpu.vector_store %arg5[%c7_112, %c0_113, %c0_114], %113 {strides = array<i32>} : memref<8x16x128xf32, #tpu.memory_space<vmem>>, vector<1x16x128xf32>,
    return
  }
  func.func @transform_0(%arg0: i32, %arg1: i32) -> (i32, i32, i32) {
    %c0_i32 = arith.constant 0 : i32
    %c0_i32_0 = arith.constant 0 : i32
    %c0_i32_1 = arith.constant 0 : i32
    return %arg0, %c0_i32, %c0_i32_0 : i32, i32, i32
  }
  func.func @transform_1(%arg0: i32, %arg1: i32) -> (i32, i32, i32) {
    %c0_i32 = arith.constant 0 : i32
    %c0_i32_0 = arith.constant 0 : i32
    %c0_i32_1 = arith.constant 0 : i32
    return %arg1, %c0_i32, %c0_i32_0 : i32, i32, i32
  }
  func.func @transform_2(%arg0: i32, %arg1: i32) -> (i32, i32, i32) {
    %c0_i32 = arith.constant 0 : i32
    %c0_i32_0 = arith.constant 0 : i32
    %c0_i32_1 = arith.constant 0 : i32
    return %arg1, %c0_i32, %c0_i32_0 : i32, i32, i32
  }
  func.func @transform_3(%arg0: i32, %arg1: i32) -> (i32, i32, i32) {
    %c0_i32 = arith.constant 0 : i32
    %c0_i32_0 = arith.constant 0 : i32
    return %arg1, %arg0, %c0_i32 : i32, i32, i32
  }
}

</mosaic_0001>

<llo_original>
// kernel: tpu_custom_call.1
$region0: #{tpu_custom_call.1}
  #allocation0 [shape = 'u32[]', space=smem, size = 0x4, offset = 0x4, fixed_abs, tag = 'smem constant byte address 0x4 - core index']
  #allocation1 [shape = 'u32[144,128]{1,0:T(1,128)}', space=vmem, size = 0x12000, scoped, tag = 'internal scratch']
  #allocation2 [shape = 'f32[128,16]{1,0:T(8,128)}', space=vmem, size = 0x10000, scoped, tag = 'scratch operand']
  %s0 = inlined_call_operand.hbm [shape: f32[8,16,16], index: 0, kind: input, shape index: {}]
  %s1 = inlined_call_operand.hbm [shape: f32[2,16,16], index: 1, kind: input, shape index: {}]
  %s2 = inlined_call_operand.hbm [shape: f32[16,16,128], index: 2, kind: input, shape index: {}]
  %s3 = inlined_call_operand.hbm [shape: f32[16,16,128], index: 3, kind: output, shape index: {}]
  %s4 = sld [smem:[#allocation0]]
  $region57: #{tpu_custom_call.1} parent=0
    _
  %s6 = ssub.s32 1, %s4
  %s7 = scalar_select 0, %s6, %s4
  $region1: #{tpu_custom_call.1} parent=0
    #allocation3 [shape = 'u8[65536]{0}', space=vmem, size = 0x10000, scoped, tag = 'input window, operand 0, single buffered']
    #allocation4 [shape = 's32[2]{0}', space=sflag, size = 0x8, scoped, tag = 'scoped memory for tpu_custom_call.1']
    #allocation5 [shape = 's32[2]{0}', space=sflag, size = 0x8, scoped, tag = 'scoped memory for tpu_custom_call.1']
    #allocation6 [shape = 'u8[16384]{0}', space=vmem, size = 0x4000, scoped, tag = 'input window, operand 1']
    #allocation7 [shape = 's32[2]{0}', space=sflag, size = 0x8, scoped, tag = 'scoped memory for tpu_custom_call.1']
    #allocation8 [shape = 'u8[131072]{0}', space=vmem, size = 0x20000, scoped, tag = 'input window, operand 2']
    #allocation9 [shape = 'u8[131072]{0}', space=vmem, size = 0x20000, scoped, tag = 'output window, operand 0']
    %8 = vsyncpa [#allocation4], 0
    %9 = vsyncpa [#allocation7], 0
    %s10 = scalar_lea.sflag [#allocation7], 1
    %11 = vsyncpa %s10, 0
    %12 = vsyncpa [#allocation5], 0
    %s13 = scalar_lea.sflag [#allocation5], 1
    %14 = vsyncpa %s13, 0
    loop: start=0, step=1, limit=4
    $region2: #{tpu_custom_call.1} parent=1 // loop_pre_header
      _
    $region3: #{tpu_custom_call.1} parent=1 // loop_header
      %s16 = sphi 0, %s20
      %p17 = scmp.ge.s32.totalorder %s16, 4
      %s23 = sphi 0, %s35
      %s24 = sphi 0, %s31
      %s25 = sphi 0, %s23
      %s26 = sphi 0, %s24
      %s27 = sphi 0, %s25
      %s28 = sphi 0, %s26
      %s38 = sphi 0, %s40
      %s41 = sphi 0, %s38
      %s42 = sphi 0, %s41
      %s58 = sphi 0, %s42
      %s64 = sphi 0, %s66
      %s67 = sphi 0, %s64
      %s68 = sphi 0, %s67
      %s84 = sphi 0, %s68
      %s90 = sphi 0, %s92
      %s93 = sphi 0, %s90
      %s94 = sphi 0, %s93
      %s110 = sphi 0, %s94
      %s118 = sphi 0, %s120
      %s121 = sphi 0, %s118
      %s122 = sphi 0, %s121
      %s138 = sphi 0, %s122
    $region4: #{tpu_custom_call.1} parent=1 // loop_header_branch
      %19 = sbr.rel (%p17) target = $region8
    $region5: #{tpu_custom_call.1} parent=1 // loop_body
      %s21 = ssub.s32 %s16, 1
      %s22 = ssub.s32 %s16, 2
      %s29 = sadd.s32 1, %s24
      %p30 = scmp.ge.s32.totalorder %s29, 2
      %s31 = scalar_select %p30, 0, %s29
      %s32 = sadd.s32 1, %s23
      %s33 = scalar_select %p30, %s32, %s23
      %p34 = scmp.ge.s32.totalorder %s33, 1
      %s35 = scalar_select %p34, 0, %s33
      %s36 = ssub.s32 %s23, %s35
      %p37 = scmp.eq.s32.totalorder %s36, 0
      %s39 = sadd.s32 %s38, 1
      %s40 = scalar_select %p37, %s38, %s39
      %p43 = pneg %p37
      %p44 = scmp.eq.s32.totalorder %s16, 1
      %p45 = por %p43, %p44
      %p46 = scmp.ne.s32.totalorder %s38, %s41
      %p47 = scmp.eq.s32.totalorder %s16, 0
      %p48 = por %p46, %p47
      %p49 = scmp.ne.s32.totalorder %s38, %s41
      %p50 = scmp.eq.s32.totalorder %s21, 1
      %p51 = por %p49, %p50
      %p52 = scmp.ne.s32.totalorder %s41, %s42
      %p53 = scmp.eq.s32.totalorder %s21, 0
      %p54 = por %p52, %p53
      %p55 = scmp.ne.s32.totalorder %s41, %s42
      %p56 = scmp.eq.s32.totalorder %s22, 1
      %p57 = por %p55, %p56
      %p59 = scmp.ne.s32.totalorder %s42, %s58
      %p60 = scmp.eq.s32.totalorder %s22, 0
      %p61 = por %p59, %p60
      %s62 = ssub.s32 %s24, %s31
      %p63 = scmp.eq.s32.totalorder %s62, 0
      %s65 = sadd.s32 %s64, 1
      %s66 = scalar_select %p63, %s64, %s65
      %p69 = pneg %p63
      %p70 = scmp.eq.s32.totalorder %s16, 1
      %p71 = por %p69, %p70
      %p72 = scmp.ne.s32.totalorder %s64, %s67
      %p73 = scmp.eq.s32.totalorder %s16, 0
      %p74 = por %p72, %p73
      %p75 = scmp.ne.s32.totalorder %s64, %s67
      %p76 = scmp.eq.s32.totalorder %s21, 1
      %p77 = por %p75, %p76
      %p78 = scmp.ne.s32.totalorder %s67, %s68
      %p79 = scmp.eq.s32.totalorder %s21, 0
      %p80 = por %p78, %p79
      %p81 = scmp.ne.s32.totalorder %s67, %s68
      %p82 = scmp.eq.s32.totalorder %s22, 1
      %p83 = por %p81, %p82
      %p85 = scmp.ne.s32.totalorder %s68, %s84
      %p86 = scmp.eq.s32.totalorder %s22, 0
      %p87 = por %p85, %p86
      %s88 = ssub.s32 %s24, %s31
      %p89 = scmp.eq.s32.totalorder %s88, 0
      %s91 = sadd.s32 %s90, 1
      %s92 = scalar_select %p89, %s90, %s91
      %p95 = pneg %p89
      %p96 = scmp.eq.s32.totalorder %s16, 1
      %p97 = por %p95, %p96
      %p98 = scmp.ne.s32.totalorder %s90, %s93
      %p99 = scmp.eq.s32.totalorder %s16, 0
      %p100 = por %p98, %p99
      %p101 = scmp.ne.s32.totalorder %s90, %s93
      %p102 = scmp.eq.s32.totalorder %s21, 1
      %p103 = por %p101, %p102
      %p104 = scmp.ne.s32.totalorder %s93, %s94
      %p105 = scmp.eq.s32.totalorder %s21, 0
      %p106 = por %p104, %p105
      %p107 = scmp.ne.s32.totalorder %s93, %s94
      %p108 = scmp.eq.s32.totalorder %s22, 1
      %p109 = por %p107, %p108
      %p111 = scmp.ne.s32.totalorder %s94, %s110
      %p112 = scmp.eq.s32.totalorder %s22, 0
      %p113 = por %p111, %p112
      %s114 = ssub.s32 %s24, %s31
      %s115 = ssub.s32 %s23, %s35
      %s116 = sor.u32 %s114, %s115
      %p117 = scmp.eq.s32.totalorder %s116, 0
      %s119 = sadd.s32 %s118, 1
      %s120 = scalar_select %p117, %s118, %s119
      %p123 = pneg %p117
      %p124 = scmp.eq.s32.totalorder %s16, 1
      %p125 = por %p123, %p124
      %p126 = scmp.ne.s32.totalorder %s118, %s121
      %p127 = scmp.eq.s32.totalorder %s16, 0
      %p128 = por %p126, %p127
      %p129 = scmp.ne.s32.totalorder %s118, %s121
      %p130 = scmp.eq.s32.totalorder %s21, 1
      %p131 = por %p129, %p130
      %p132 = scmp.ne.s32.totalorder %s121, %s122
      %p133 = scmp.eq.s32.totalorder %s21, 0
      %p134 = por %p132, %p133
      %p135 = scmp.ne.s32.totalorder %s121, %s122
      %p136 = scmp.eq.s32.totalorder %s22, 1
      %p137 = por %p135, %p136
      %p139 = scmp.ne.s32.totalorder %s122, %s138
      %p140 = scmp.eq.s32.totalorder %s22, 0
      %p141 = por %p139, %p140
      %p142 = scmp.le.s32.totalorder 1, %s16
      %p143 = scmp.lt.s32.totalorder %s16, 3
      %p144 = pnand %p142, %p143
      %p145 = pneg %p144
      // Predicated region
      $region9: #{tpu_custom_call.1} parent=5 // pred_check
        _
      $region10: #{tpu_custom_call.1} parent=5 // pred_check_branch
        %147 = sbr.rel (%p144) target = $region12
      $region11: #{tpu_custom_call.1} parent=5 // pred_region
        %s148 = ssub.s32 %s16, 1
        // Predicated region
        $region13: #{tpu_custom_call.1} parent=11 // pred_check
          %p149 = pneg %p54
        $region14: #{tpu_custom_call.1} parent=11 // pred_check_branch
          %151 = sbr.rel (%p149) target = $region16
        $region15: #{tpu_custom_call.1} parent=11 // pred_region
          %s152 = smul.u32 8, %s25
          %s154 = ssub.s32 2048, 2048
          %155 = vsyncadd [#allocation4], %s154
          %s156 = smul.addr %s152, 2
          %s157 = smul.addr %s156, 128
          %s158 = scalar_lea.hbm %s0, %s157
          %s159 = sshll.u32 [#allocation3], 4
          %s160 = int_to_ptr.vmem [resolvable:$true] %s159
          %165 = dma.hbm_to_vmem [thread:$0]  %s158, 2048, %s160, [#allocation4], 128, 128, 8
        $region16: #{tpu_custom_call.1} parent=11 // pred_fallthru
          _
      $region12: #{tpu_custom_call.1} parent=5 // pred_fallthru
        _
      %p166 = scmp.lt.s32.totalorder %s16, 2
      // Predicated region
      $region17: #{tpu_custom_call.1} parent=5 // pred_check
        %p167 = pneg %p166
      $region18: #{tpu_custom_call.1} parent=5 // pred_check_branch
        %169 = sbr.rel (%p167) target = $region20
      $region19: #{tpu_custom_call.1} parent=5 // pred_region
        // Predicated region
        $region21: #{tpu_custom_call.1} parent=19 // pred_check
          %p170 = pneg %p74
        $region22: #{tpu_custom_call.1} parent=19 // pred_check_branch
          %172 = sbr.rel (%p170) target = $region24
        $region23: #{tpu_custom_call.1} parent=19 // pred_region
          %s173 = sand.u32 %s16, 1
          %s174 = scalar_lea.sflag [#allocation7], %s173
          %s175 = sand.u32 %s64, 1
          %s176 = smul.addr %s175, 16
          %s177 = scalar_lea.vmem [#allocation6], %s176
          %s179 = ssub.s32 256, 256
          %180 = vsyncadd %s174, %s179
          %s181 = smul.addr %s24, 2
          %s182 = smul.addr %s181, 128
          %s183 = scalar_lea.hbm %s1, %s182
          %s184 = sshll.u32 %s177, 4
          %s185 = int_to_ptr.vmem [resolvable:$true] %s184
          %190 = dma.hbm_to_vmem [thread:$0]  %s183, 256, %s185, %s174, 128, 128, 8
        $region24: #{tpu_custom_call.1} parent=19 // pred_fallthru
          _
        // Predicated region
        $region25: #{tpu_custom_call.1} parent=19 // pred_check
          %p191 = pneg %p100
        $region26: #{tpu_custom_call.1} parent=19 // pred_check_branch
          %193 = sbr.rel (%p191) target = $region28
        $region27: #{tpu_custom_call.1} parent=19 // pred_region
          %s194 = sand.u32 %s16, 1
          %s195 = scalar_lea.sflag [#allocation7], %s194
          %s196 = sand.u32 %s90, 1
          %s197 = smul.addr %s196, 128
          %s198 = scalar_lea.vmem [#allocation8], %s197
          %s199 = smul.u32 8, %s24
          %s201 = ssub.s32 2048, 2048
          %202 = vsyncadd %s195, %s201
          %s203 = smul.addr %s199, 2
          %s204 = smul.addr %s203, 128
          %s205 = scalar_lea.hbm %s2, %s204
          %s206 = sshll.u32 %s198, 4
          %s207 = int_to_ptr.vmem [resolvable:$true] %s206
          %212 = dma.hbm_to_vmem [thread:$0]  %s205, 2048, %s207, %s195, 128, 128, 8
        $region28: #{tpu_custom_call.1} parent=19 // pred_fallthru
          _
      $region20: #{tpu_custom_call.1} parent=5 // pred_fallthru
        _
      %p213 = scmp.le.s32.totalorder 1, %s16
      %p214 = scmp.lt.s32.totalorder %s16, 3
      %p215 = pnand %p213, %p214
      %p216 = pneg %p215
      // Predicated region
      $region29: #{tpu_custom_call.1} parent=5 // pred_check
        _
      $region30: #{tpu_custom_call.1} parent=5 // pred_check_branch
        %218 = sbr.rel (%p215) target = $region32
      $region31: #{tpu_custom_call.1} parent=5 // pred_region
        %s219 = ssub.s32 %s16, 1
        // Predicated region
        $region33: #{tpu_custom_call.1} parent=31 // pred_check
          %p220 = pneg %p54
        $region34: #{tpu_custom_call.1} parent=31 // pred_check_branch
          %222 = sbr.rel (%p220) target = $region36
        $region35: #{tpu_custom_call.1} parent=31 // pred_region
          %223 = dma.done [#allocation4], 2048
        $region36: #{tpu_custom_call.1} parent=31 // pred_fallthru
          _
        %s224 = sand.u32 %s21, 1
        %s225 = scalar_lea.sflag [#allocation7], %s224
        %s226 = sand.u32 %s67, 1
        %s227 = smul.addr %s226, 16
        %s228 = scalar_lea.vmem [#allocation6], %s227
        // Predicated region
        $region37: #{tpu_custom_call.1} parent=31 // pred_check
          %p229 = pneg %p80
        $region38: #{tpu_custom_call.1} parent=31 // pred_check_branch
          %231 = sbr.rel (%p229) target = $region40
        $region39: #{tpu_custom_call.1} parent=31 // pred_region
          %232 = dma.done %s225, 256
        $region40: #{tpu_custom_call.1} parent=31 // pred_fallthru
          _
        %s233 = sand.u32 %s21, 1
        %s234 = scalar_lea.sflag [#allocation7], %s233
        %s235 = sand.u32 %s93, 1
        %s236 = smul.addr %s235, 128
        %s237 = scalar_lea.vmem [#allocation8], %s236
        // Predicated region
        $region41: #{tpu_custom_call.1} parent=31 // pred_check
          %p238 = pneg %p106
        $region42: #{tpu_custom_call.1} parent=31 // pred_check_branch
          %240 = sbr.rel (%p238) target = $region44
        $region43: #{tpu_custom_call.1} parent=31 // pred_region
          %241 = dma.done %s234, 2048
        $region44: #{tpu_custom_call.1} parent=31 // pred_fallthru
          _
        %p242 = pneg %p54
        %p243 = pneg %p51
        %s244 = sand.u32 %s21, 1
        %s245 = scalar_lea.sflag [#allocation7], %s244
        %s246 = sand.u32 %s67, 1
        %s247 = smul.addr %s246, 16
        %s248 = scalar_lea.vmem [#allocation6], %s247
        %p249 = pneg %p80
        %p250 = pneg %p77
        %s251 = sand.u32 %s21, 1
        %s252 = scalar_lea.sflag [#allocation7], %s251
        %s253 = sand.u32 %s93, 1
        %s254 = smul.addr %s253, 128
        %s255 = scalar_lea.vmem [#allocation8], %s254
        %p256 = pneg %p106
        %p257 = pneg %p103
        %p258 = pneg %p134
        %p259 = pneg %p131
        %s260 = sand.u32 %s121, 1
        %s261 = scalar_lea.sflag [#allocation5], %s260
        %s262 = sand.u32 %s121, 1
        %s263 = smul.addr %s262, 128
        %s264 = scalar_lea.vmem [#allocation9], %s263
        %s265 = smul.u32 8, %s25
        %s266 = smul.u32 8, %s26
        %s267 = smul.u32 8, %s26
        %s268 = smul.u32 2, %s25
        %v269 = vld [vmem:[%s228] sm:$0xff]
        %v270 = vld [vmem:[%s228 + $0x8] sm:$0xff]
        %v271 = vld [vmem:[#allocation3] sm:$0xff]
        %v272 = vld [vmem:[#allocation3 + $0x8] sm:$0xff]
        %vm273 = vcmask 130048
        %v275 = vsel %vm273, %v269, 0
        %v278 = vsel %vm273, %v270, 0
        %v281 = vsel %vm273, %v271, 0
        %v284 = vsel %vm273, %v272, 0
        %286 = vmatprep.subr.mxu0 0.0
        %287 = vmatpush1.xpose.msra.mxu0 %v281
        %288 = vmatprep.subr.mxu0 0.0
        %289 = vmatpush1.xpose.msra.mxu0 %v284
        %290 = vmatprep.subr.mxu0 0.0
        %291 = vmatpush1.xpose.msra.mxu0 0.0
        %292 = vmatprep.subr.mxu0 0.0
        %293 = vmatpush1.xpose.msra.mxu0 0.0
        %294 = vmatprep.subr.mxu0 0.0
        %295 = vmatpush1.xpose.msra.mxu0 0.0
        %296 = vmatprep.subr.mxu0 0.0
        %297 = vmatpush1.xpose.msra.mxu0 0.0
        %298 = vmatprep.subr.mxu0 0.0
        %299 = vmatpush1.xpose.msra.mxu0 0.0
        %300 = vmatprep.subr.mxu0 0.0
        %301 = vmatpush1.xpose.msra.mxu0 0.0
        %302 = vmatprep.subr.mxu0 0.0
        %303 = vmatpush1.xpose.msra.mxu0 0.0
        %304 = vmatprep.subr.mxu0 0.0
        %305 = vmatpush1.xpose.msra.mxu0 0.0
        %306 = vmatprep.subr.mxu0 0.0
        %307 = vmatpush1.xpose.msra.mxu0 0.0
        %308 = vmatprep.subr.mxu0 0.0
        %309 = vmatpush1.xpose.msra.mxu0 0.0
        %310 = vmatprep.subr.mxu0 0.0
        %311 = vmatpush1.xpose.msra.mxu0 0.0
        %312 = vmatprep.subr.mxu0 0.0
        %313 = vmatpush1.xpose.msra.mxu0 0.0
        %314 = vmatprep.subr.mxu0 0.0
        %315 = vmatpush1.xpose.msra.mxu0 0.0
        %316 = vmatprep.subr.mxu0 0.0
        %317 = vmatpush1.xpose.msra.mxu0 0.0
        %318 = vmatprep.subr.mxu0 0.0
        %319 = vmatpush1.xpose.msra.mxu0 0.0
        %320 = vmatprep.subr.mxu0 0.0
        %321 = vmatpush1.xpose.msra.mxu0 0.0
        %322 = vmatprep.subr.mxu0 0.0
        %323 = vmatpush1.xpose.msra.mxu0 0.0
        %324 = vmatprep.subr.mxu0 0.0
        %325 = vmatpush1.xpose.msra.mxu0 0.0
        %326 = vmatprep.subr.mxu0 0.0
        %327 = vmatpush1.xpose.msra.mxu0 0.0
        %328 = vmatprep.subr.mxu0 0.0
        %329 = vmatpush1.xpose.msra.mxu0 0.0
        %330 = vmatprep.subr.mxu0 0.0
        %331 = vmatpush1.xpose.msra.mxu0 0.0
        %332 = vmatprep.subr.mxu0 0.0
        %333 = vmatpush1.xpose.msra.mxu0 0.0
        %334 = vmatprep.subr.mxu0 0.0
        %335 = vmatpush1.xpose.msra.mxu0 0.0
        %336 = vmatprep.subr.mxu0 0.0
        %337 = vmatpush1.xpose.msra.mxu0 0.0
        %338 = vmatprep.subr.mxu0 0.0
        %339 = vmatpush1.xpose.msra.mxu0 0.0
        %340 = vmatprep.subr.mxu0 0.0
        %341 = vmatpush1.xpose.msra.mxu0 0.0
        %342 = vmatprep.subr.mxu0 0.0
        %343 = vmatpush1.xpose.msra.mxu0 0.0
        %344 = vmatprep.subr.mxu0 0.0
        %345 = vmatpush1.xpose.msra.mxu0 0.0
        %346 = vmatprep.subr.mxu0 0.0
        %347 = vmatpush1.xpose.msra.mxu0 0.0
        %348 = vmatprep.subr.mxu0 0.0
        %349 = vmatpush1.xpose.msra.mxu0 0.0
        %350 = vmatprep.mubr.f32.mxu0 0.0
        %351 = vmatmul.mubr.f32.gmra.mrb[0].mxu0 %v275
        %v352 = vpop.f32.mrb[0].mxu0
        %v353 = vadd.f32 0.0, %v352
        %v354 = vpop.f32.mrb[0].mxu0
        %355 = vmatprep.mubr.f32.mxu0 0.0
        %356 = vmatmul.mubr.f32.gmra.mrb[0].mxu0 %v278
        %v357 = vpop.f32.mrb[0].mxu0
        %v358 = vadd.f32 0.0, %v357
        %v359 = vpop.f32.mrb[0].mxu0
        %360 = vdwg.mxu0
        %361 = vst.msk [vmem:[#allocation2] sm:$0xff] %vm273, %v353
        %362 = vst.msk [vmem:[#allocation2 + $0x40] sm:$0xff] %vm273, %v358
        %s363 = scalar_lea.vmem [#allocation3], 16
        %v364 = vld [vmem:[%s363] sm:$0xff]
        %v365 = vld [vmem:[%s363 + $0x8] sm:$0xff]
        %v367 = vsel %vm273, %v364, 0
        %v370 = vsel %vm273, %v365, 0
        %372 = vmatprep.subr.mxu0 0.0
        %373 = vmatpush1.xpose.msra.mxu0 %v367
        %374 = vmatprep.subr.mxu0 0.0
        %375 = vmatpush1.xpose.msra.mxu0 %v370
        %376 = vmatprep.subr.mxu0 0.0
        %377 = vmatpush1.xpose.msra.mxu0 0.0
        %378 = vmatprep.subr.mxu0 0.0
        %379 = vmatpush1.xpose.msra.mxu0 0.0
        %380 = vmatprep.subr.mxu0 0.0
        %381 = vmatpush1.xpose.msra.mxu0 0.0
        %382 = vmatprep.subr.mxu0 0.0
        %383 = vmatpush1.xpose.msra.mxu0 0.0
        %384 = vmatprep.subr.mxu0 0.0
        %385 = vmatpush1.xpose.msra.mxu0 0.0
        %386 = vmatprep.subr.mxu0 0.0
        %387 = vmatpush1.xpose.msra.mxu0 0.0
        %388 = vmatprep.subr.mxu0 0.0
        %389 = vmatpush1.xpose.msra.mxu0 0.0
        %390 = vmatprep.subr.mxu0 0.0
        %391 = vmatpush1.xpose.msra.mxu0 0.0
        %392 = vmatprep.subr.mxu0 0.0
        %393 = vmatpush1.xpose.msra.mxu0 0.0
        %394 = vmatprep.subr.mxu0 0.0
        %395 = vmatpush1.xpose.msra.mxu0 0.0
        %396 = vmatprep.subr.mxu0 0.0
        %397 = vmatpush1.xpose.msra.mxu0 0.0
        %398 = vmatprep.subr.mxu0 0.0
        %399 = vmatpush1.xpose.msra.mxu0 0.0
        %400 = vmatprep.subr.mxu0 0.0
        %401 = vmatpush1.xpose.msra.mxu0 0.0
        %402 = vmatprep.subr.mxu0 0.0
        %403 = vmatpush1.xpose.msra.mxu0 0.0
        %404 = vmatprep.subr.mxu0 0.0
        %405 = vmatpush1.xpose.msra.mxu0 0.0
        %406 = vmatprep.subr.mxu0 0.0
        %407 = vmatpush1.xpose.msra.mxu0 0.0
        %408 = vmatprep.subr.mxu0 0.0
        %409 = vmatpush1.xpose.msra.mxu0 0.0
        %410 = vmatprep.subr.mxu0 0.0
        %411 = vmatpush1.xpose.msra.mxu0 0.0
        %412 = vmatprep.subr.mxu0 0.0
        %413 = vmatpush1.xpose.msra.mxu0 0.0
        %414 = vmatprep.subr.mxu0 0.0
        %415 = vmatpush1.xpose.msra.mxu0 0.0
        %416 = vmatprep.subr.mxu0 0.0
        %417 = vmatpush1.xpose.msra.mxu0 0.0
        %418 = vmatprep.subr.mxu0 0.0
        %419 = vmatpush1.xpose.msra.mxu0 0.0
        %420 = vmatprep.subr.mxu0 0.0
        %421 = vmatpush1.xpose.msra.mxu0 0.0
        %422 = vmatprep.subr.mxu0 0.0
        %423 = vmatpush1.xpose.msra.mxu0 0.0
        %424 = vmatprep.subr.mxu0 0.0
        %425 = vmatpush1.xpose.msra.mxu0 0.0
        %426 = vmatprep.subr.mxu0 0.0
        %427 = vmatpush1.xpose.msra.mxu0 0.0
        %428 = vmatprep.subr.mxu0 0.0
        %429 = vmatpush1.xpose.msra.mxu0 0.0
        %430 = vmatprep.subr.mxu0 0.0
        %431 = vmatpush1.xpose.msra.mxu0 0.0
        %432 = vmatprep.subr.mxu0 0.0
        %433 = vmatpush1.xpose.msra.mxu0 0.0
        %434 = vmatprep.subr.mxu0 0.0
        %435 = vmatpush1.xpose.msra.mxu0 0.0
        %436 = vmatprep.mubr.f32.mxu0 0.0
        %437 = vmatmul.mubr.f32.gmra.mrb[0].mxu0 %v275
        %v438 = vpop.f32.mrb[0].mxu0
        %v439 = vadd.f32 0.0, %v438
        %v440 = vpop.f32.mrb[0].mxu0
        %441 = vmatprep.mubr.f32.mxu0 0.0
        %442 = vmatmul.mubr.f32.gmra.mrb[0].mxu0 %v278
        %v443 = vpop.f32.mrb[0].mxu0
        %v444 = vadd.f32 0.0, %v443
        %v445 = vpop.f32.mrb[0].mxu0
        %446 = vdwg.mxu0
        %447 = vst.msk [vmem:[#allocation2 + $0x8] sm:$0xff] %vm273, %v439
        %448 = vst.msk [vmem:[#allocation2 + $0x48] sm:$0xff] %vm273, %v444
        %s449 = scalar_lea.vmem [#allocation3], 32
        %v450 = vld [vmem:[%s449] sm:$0xff]
        %v451 = vld [vmem:[%s449 + $0x8] sm:$0xff]
        %v453 = vsel %vm273, %v450, 0
        %v456 = vsel %vm273, %v451, 0
        %458 = vmatprep.subr.mxu0 0.0
        %459 = vmatpush1.xpose.msra.mxu0 %v453
        %460 = vmatprep.subr.mxu0 0.0
        %461 = vmatpush1.xpose.msra.mxu0 %v456
        %462 = vmatprep.subr.mxu0 0.0
        %463 = vmatpush1.xpose.msra.mxu0 0.0
        %464 = vmatprep.subr.mxu0 0.0
        %465 = vmatpush1.xpose.msra.mxu0 0.0
        %466 = vmatprep.subr.mxu0 0.0
        %467 = vmatpush1.xpose.msra.mxu0 0.0
        %468 = vmatprep.subr.mxu0 0.0
        %469 = vmatpush1.xpose.msra.mxu0 0.0
        %470 = vmatprep.subr.mxu0 0.0
        %471 = vmatpush1.xpose.msra.mxu0 0.0
        %472 = vmatprep.subr.mxu0 0.0
        %473 = vmatpush1.xpose.msra.mxu0 0.0
        %474 = vmatprep.subr.mxu0 0.0
        %475 = vmatpush1.xpose.msra.mxu0 0.0
        %476 = vmatprep.subr.mxu0 0.0
        %477 = vmatpush1.xpose.msra.mxu0 0.0
        %478 = vmatprep.subr.mxu0 0.0
        %479 = vmatpush1.xpose.msra.mxu0 0.0
        %480 = vmatprep.subr.mxu0 0.0
        %481 = vmatpush1.xpose.msra.mxu0 0.0
        %482 = vmatprep.subr.mxu0 0.0
        %483 = vmatpush1.xpose.msra.mxu0 0.0
        %484 = vmatprep.subr.mxu0 0.0
        %485 = vmatpush1.xpose.msra.mxu0 0.0
        %486 = vmatprep.subr.mxu0 0.0
        %487 = vmatpush1.xpose.msra.mxu0 0.0
        %488 = vmatprep.subr.mxu0 0.0
        %489 = vmatpush1.xpose.msra.mxu0 0.0
        %490 = vmatprep.subr.mxu0 0.0
        %491 = vmatpush1.xpose.msra.mxu0 0.0
        %492 = vmatprep.subr.mxu0 0.0
        %493 = vmatpush1.xpose.msra.mxu0 0.0
        %494 = vmatprep.subr.mxu0 0.0
        %495 = vmatpush1.xpose.msra.mxu0 0.0
        %496 = vmatprep.subr.mxu0 0.0
        %497 = vmatpush1.xpose.msra.mxu0 0.0
        %498 = vmatprep.subr.mxu0 0.0
        %499 = vmatpush1.xpose.msra.mxu0 0.0
        %500 = vmatprep.subr.mxu0 0.0
        %501 = vmatpush1.xpose.msra.mxu0 0.0
        %502 = vmatprep.subr.mxu0 0.0
        %503 = vmatpush1.xpose.msra.mxu0 0.0
        %504 = vmatprep.subr.mxu0 0.0
        %505 = vmatpush1.xpose.msra.mxu0 0.0
        %506 = vmatprep.subr.mxu0 0.0
        %507 = vmatpush1.xpose.msra.mxu0 0.0
        %508 = vmatprep.subr.mxu0 0.0
        %509 = vmatpush1.xpose.msra.mxu0 0.0
        %510 = vmatprep.subr.mxu0 0.0
        %511 = vmatpush1.xpose.msra.mxu0 0.0
        %512 = vmatprep.subr.mxu0 0.0
        %513 = vmatpush1.xpose.msra.mxu0 0.0
        %514 = vmatprep.subr.mxu0 0.0
        %515 = vmatpush1.xpose.msra.mxu0 0.0
        %516 = vmatprep.subr.mxu0 0.0
        %517 = vmatpush1.xpose.msra.mxu0 0.0
        %518 = vmatprep.subr.mxu0 0.0
        %519 = vmatpush1.xpose.msra.mxu0 0.0
        %520 = vmatprep.subr.mxu0 0.0
        %521 = vmatpush1.xpose.msra.mxu0 0.0
        %522 = vmatprep.mubr.f32.mxu0 0.0
        %523 = vmatmul.mubr.f32.gmra.mrb[0].mxu0 %v275
        %v524 = vpop.f32.mrb[0].mxu0
        %v525 = vadd.f32 0.0, %v524
        %v526 = vpop.f32.mrb[0].mxu0
        %527 = vmatprep.mubr.f32.mxu0 0.0
        %528 = vmatmul.mubr.f32.gmra.mrb[0].mxu0 %v278
        %v529 = vpop.f32.mrb[0].mxu0
        %v530 = vadd.f32 0.0, %v529
        %v531 = vpop.f32.mrb[0].mxu0
        %532 = vdwg.mxu0
        %533 = vst.msk [vmem:[#allocation2 + $0x10] sm:$0xff] %vm273, %v525
        %534 = vst.msk [vmem:[#allocation2 + $0x50] sm:$0xff] %vm273, %v530
        %s535 = scalar_lea.vmem [#allocation3], 48
        %v536 = vld [vmem:[%s535] sm:$0xff]
        %v537 = vld [vmem:[%s535 + $0x8] sm:$0xff]
        %v539 = vsel %vm273, %v536, 0
        %v542 = vsel %vm273, %v537, 0
        %544 = vmatprep.subr.mxu0 0.0
        %545 = vmatpush1.xpose.msra.mxu0 %v539
        %546 = vmatprep.subr.mxu0 0.0
        %547 = vmatpush1.xpose.msra.mxu0 %v542
        %548 = vmatprep.subr.mxu0 0.0
        %549 = vmatpush1.xpose.msra.mxu0 0.0
        %550 = vmatprep.subr.mxu0 0.0
        %551 = vmatpush1.xpose.msra.mxu0 0.0
        %552 = vmatprep.subr.mxu0 0.0
        %553 = vmatpush1.xpose.msra.mxu0 0.0
        %554 = vmatprep.subr.mxu0 0.0
        %555 = vmatpush1.xpose.msra.mxu0 0.0
        %556 = vmatprep.subr.mxu0 0.0
        %557 = vmatpush1.xpose.msra.mxu0 0.0
        %558 = vmatprep.subr.mxu0 0.0
        %559 = vmatpush1.xpose.msra.mxu0 0.0
        %560 = vmatprep.subr.mxu0 0.0
        %561 = vmatpush1.xpose.msra.mxu0 0.0
        %562 = vmatprep.subr.mxu0 0.0
        %563 = vmatpush1.xpose.msra.mxu0 0.0
        %564 = vmatprep.subr.mxu0 0.0
        %565 = vmatpush1.xpose.msra.mxu0 0.0
        %566 = vmatprep.subr.mxu0 0.0
        %567 = vmatpush1.xpose.msra.mxu0 0.0
        %568 = vmatprep.subr.mxu0 0.0
        %569 = vmatpush1.xpose.msra.mxu0 0.0
        %570 = vmatprep.subr.mxu0 0.0
        %571 = vmatpush1.xpose.msra.mxu0 0.0
        %572 = vmatprep.subr.mxu0 0.0
        %573 = vmatpush1.xpose.msra.mxu0 0.0
        %574 = vmatprep.subr.mxu0 0.0
        %575 = vmatpush1.xpose.msra.mxu0 0.0
        %576 = vmatprep.subr.mxu0 0.0
        %577 = vmatpush1.xpose.msra.mxu0 0.0
        %578 = vmatprep.subr.mxu0 0.0
        %579 = vmatpush1.xpose.msra.mxu0 0.0
        %580 = vmatprep.subr.mxu0 0.0
        %581 = vmatpush1.xpose.msra.mxu0 0.0
        %582 = vmatprep.subr.mxu0 0.0
        %583 = vmatpush1.xpose.msra.mxu0 0.0
        %584 = vmatprep.subr.mxu0 0.0
        %585 = vmatpush1.xpose.msra.mxu0 0.0
        %586 = vmatprep.subr.mxu0 0.0
        %587 = vmatpush1.xpose.msra.mxu0 0.0
        %588 = vmatprep.subr.mxu0 0.0
        %589 = vmatpush1.xpose.msra.mxu0 0.0
        %590 = vmatprep.subr.mxu0 0.0
        %591 = vmatpush1.xpose.msra.mxu0 0.0
        %592 = vmatprep.subr.mxu0 0.0
        %593 = vmatpush1.xpose.msra.mxu0 0.0
        %594 = vmatprep.subr.mxu0 0.0
        %595 = vmatpush1.xpose.msra.mxu0 0.0
        %596 = vmatprep.subr.mxu0 0.0
        %597 = vmatpush1.xpose.msra.mxu0 0.0
        %598 = vmatprep.subr.mxu0 0.0
        %599 = vmatpush1.xpose.msra.mxu0 0.0
        %600 = vmatprep.subr.mxu0 0.0
        %601 = vmatpush1.xpose.msra.mxu0 0.0
        %602 = vmatprep.subr.mxu0 0.0
        %603 = vmatpush1.xpose.msra.mxu0 0.0
        %604 = vmatprep.subr.mxu0 0.0
        %605 = vmatpush1.xpose.msra.mxu0 0.0
        %606 = vmatprep.subr.mxu0 0.0
        %607 = vmatpush1.xpose.msra.mxu0 0.0
        %608 = vmatprep.mubr.f32.mxu0 0.0
        %609 = vmatmul.mubr.f32.gmra.mrb[0].mxu0 %v275
        %v610 = vpop.f32.mrb[0].mxu0
        %v611 = vadd.f32 0.0, %v610
        %v612 = vpop.f32.mrb[0].mxu0
        %613 = vmatprep.mubr.f32.mxu0 0.0
        %614 = vmatmul.mubr.f32.gmra.mrb[0].mxu0 %v278
        %v615 = vpop.f32.mrb[0].mxu0
        %v616 = vadd.f32 0.0, %v615
        %v617 = vpop.f32.mrb[0].mxu0
        %618 = vdwg.mxu0
        %619 = vst.msk [vmem:[#allocation2 + $0x18] sm:$0xff] %vm273, %v611
        %620 = vst.msk [vmem:[#allocation2 + $0x58] sm:$0xff] %vm273, %v616
        %s621 = scalar_lea.vmem [#allocation3], 64
        %v622 = vld [vmem:[%s621] sm:$0xff]
        %v623 = vld [vmem:[%s621 + $0x8] sm:$0xff]
        %v625 = vsel %vm273, %v622, 0
        %v628 = vsel %vm273, %v623, 0
        %630 = vmatprep.subr.mxu0 0.0
        %631 = vmatpush1.xpose.msra.mxu0 %v625
        %632 = vmatprep.subr.mxu0 0.0
        %633 = vmatpush1.xpose.msra.mxu0 %v628
        %634 = vmatprep.subr.mxu0 0.0
        %635 = vmatpush1.xpose.msra.mxu0 0.0
        %636 = vmatprep.subr.mxu0 0.0
        %637 = vmatpush1.xpose.msra.mxu0 0.0
        %638 = vmatprep.subr.mxu0 0.0
        %639 = vmatpush1.xpose.msra.mxu0 0.0
        %640 = vmatprep.subr.mxu0 0.0
        %641 = vmatpush1.xpose.msra.mxu0 0.0
        %642 = vmatprep.subr.mxu0 0.0
        %643 = vmatpush1.xpose.msra.mxu0 0.0
        %644 = vmatprep.subr.mxu0 0.0
        %645 = vmatpush1.xpose.msra.mxu0 0.0
        %646 = vmatprep.subr.mxu0 0.0
        %647 = vmatpush1.xpose.msra.mxu0 0.0
        %648 = vmatprep.subr.mxu0 0.0
        %649 = vmatpush1.xpose.msra.mxu0 0.0
        %650 = vmatprep.subr.mxu0 0.0
        %651 = vmatpush1.xpose.msra.mxu0 0.0
        %652 = vmatprep.subr.mxu0 0.0
        %653 = vmatpush1.xpose.msra.mxu0 0.0
        %654 = vmatprep.subr.mxu0 0.0
        %655 = vmatpush1.xpose.msra.mxu0 0.0
        %656 = vmatprep.subr.mxu0 0.0
        %657 = vmatpush1.xpose.msra.mxu0 0.0
        %658 = vmatprep.subr.mxu0 0.0
        %659 = vmatpush1.xpose.msra.mxu0 0.0
        %660 = vmatprep.subr.mxu0 0.0
        %661 = vmatpush1.xpose.msra.mxu0 0.0
        %662 = vmatprep.subr.mxu0 0.0
        %663 = vmatpush1.xpose.msra.mxu0 0.0
        %664 = vmatprep.subr.mxu0 0.0
        %665 = vmatpush1.xpose.msra.mxu0 0.0
        %666 = vmatprep.subr.mxu0 0.0
        %667 = vmatpush1.xpose.msra.mxu0 0.0
        %668 = vmatprep.subr.mxu0 0.0
        %669 = vmatpush1.xpose.msra.mxu0 0.0
        %670 = vmatprep.subr.mxu0 0.0
        %671 = vmatpush1.xpose.msra.mxu0 0.0
        %672 = vmatprep.subr.mxu0 0.0
        %673 = vmatpush1.xpose.msra.mxu0 0.0
        %674 = vmatprep.subr.mxu0 0.0
        %675 = vmatpush1.xpose.msra.mxu0 0.0
        %676 = vmatprep.subr.mxu0 0.0
        %677 = vmatpush1.xpose.msra.mxu0 0.0
        %678 = vmatprep.subr.mxu0 0.0
        %679 = vmatpush1.xpose.msra.mxu0 0.0
        %680 = vmatprep.subr.mxu0 0.0
        %681 = vmatpush1.xpose.msra.mxu0 0.0
        %682 = vmatprep.subr.mxu0 0.0
        %683 = vmatpush1.xpose.msra.mxu0 0.0
        %684 = vmatprep.subr.mxu0 0.0
        %685 = vmatpush1.xpose.msra.mxu0 0.0
        %686 = vmatprep.subr.mxu0 0.0
        %687 = vmatpush1.xpose.msra.mxu0 0.0
        %688 = vmatprep.subr.mxu0 0.0
        %689 = vmatpush1.xpose.msra.mxu0 0.0
        %690 = vmatprep.subr.mxu0 0.0
        %691 = vmatpush1.xpose.msra.mxu0 0.0
        %692 = vmatprep.subr.mxu0 0.0
        %693 = vmatpush1.xpose.msra.mxu0 0.0
        %694 = vmatprep.mubr.f32.mxu0 0.0
        %695 = vmatmul.mubr.f32.gmra.mrb[0].mxu0 %v275
        %v696 = vpop.f32.mrb[0].mxu0
        %v697 = vadd.f32 0.0, %v696
        %v698 = vpop.f32.mrb[0].mxu0
        %699 = vmatprep.mubr.f32.mxu0 0.0
        %700 = vmatmul.mubr.f32.gmra.mrb[0].mxu0 %v278
        %v701 = vpop.f32.mrb[0].mxu0
        %v702 = vadd.f32 0.0, %v701
        %v703 = vpop.f32.mrb[0].mxu0
        %704 = vdwg.mxu0
        %705 = vst.msk [vmem:[#allocation2 + $0x20] sm:$0xff] %vm273, %v697
        %706 = vst.msk [vmem:[#allocation2 + $0x60] sm:$0xff] %vm273, %v702
        %s707 = scalar_lea.vmem [#allocation3], 80
        %v708 = vld [vmem:[%s707] sm:$0xff]
        %v709 = vld [vmem:[%s707 + $0x8] sm:$0xff]
        %v711 = vsel %vm273, %v708, 0
        %v714 = vsel %vm273, %v709, 0
        %716 = vmatprep.subr.mxu0 0.0
        %717 = vmatpush1.xpose.msra.mxu0 %v711
        %718 = vmatprep.subr.mxu0 0.0
        %719 = vmatpush1.xpose.msra.mxu0 %v714
        %720 = vmatprep.subr.mxu0 0.0
        %721 = vmatpush1.xpose.msra.mxu0 0.0
        %722 = vmatprep.subr.mxu0 0.0
        %723 = vmatpush1.xpose.msra.mxu0 0.0
        %724 = vmatprep.subr.mxu0 0.0
        %725 = vmatpush1.xpose.msra.mxu0 0.0
        %726 = vmatprep.subr.mxu0 0.0
        %727 = vmatpush1.xpose.msra.mxu0 0.0
        %728 = vmatprep.subr.mxu0 0.0
        %729 = vmatpush1.xpose.msra.mxu0 0.0
        %730 = vmatprep.subr.mxu0 0.0
        %731 = vmatpush1.xpose.msra.mxu0 0.0
        %732 = vmatprep.subr.mxu0 0.0
        %733 = vmatpush1.xpose.msra.mxu0 0.0
        %734 = vmatprep.subr.mxu0 0.0
        %735 = vmatpush1.xpose.msra.mxu0 0.0
        %736 = vmatprep.subr.mxu0 0.0
        %737 = vmatpush1.xpose.msra.mxu0 0.0
        %738 = vmatprep.subr.mxu0 0.0
        %739 = vmatpush1.xpose.msra.mxu0 0.0
        %740 = vmatprep.subr.mxu0 0.0
        %741 = vmatpush1.xpose.msra.mxu0 0.0
        %742 = vmatprep.subr.mxu0 0.0
        %743 = vmatpush1.xpose.msra.mxu0 0.0
        %744 = vmatprep.subr.mxu0 0.0
        %745 = vmatpush1.xpose.msra.mxu0 0.0
        %746 = vmatprep.subr.mxu0 0.0
        %747 = vmatpush1.xpose.msra.mxu0 0.0
        %748 = vmatprep.subr.mxu0 0.0
        %749 = vmatpush1.xpose.msra.mxu0 0.0
        %750 = vmatprep.subr.mxu0 0.0
        %751 = vmatpush1.xpose.msra.mxu0 0.0
        %752 = vmatprep.subr.mxu0 0.0
        %753 = vmatpush1.xpose.msra.mxu0 0.0
        %754 = vmatprep.subr.mxu0 0.0
        %755 = vmatpush1.xpose.msra.mxu0 0.0
        %756 = vmatprep.subr.mxu0 0.0
        %757 = vmatpush1.xpose.msra.mxu0 0.0
        %758 = vmatprep.subr.mxu0 0.0
        %759 = vmatpush1.xpose.msra.mxu0 0.0
        %760 = vmatprep.subr.mxu0 0.0
        %761 = vmatpush1.xpose.msra.mxu0 0.0
        %762 = vmatprep.subr.mxu0 0.0
        %763 = vmatpush1.xpose.msra.mxu0 0.0
        %764 = vmatprep.subr.mxu0 0.0
        %765 = vmatpush1.xpose.msra.mxu0 0.0
        %766 = vmatprep.subr.mxu0 0.0
        %767 = vmatpush1.xpose.msra.mxu0 0.0
        %768 = vmatprep.subr.mxu0 0.0
        %769 = vmatpush1.xpose.msra.mxu0 0.0
        %770 = vmatprep.subr.mxu0 0.0
        %771 = vmatpush1.xpose.msra.mxu0 0.0
        %772 = vmatprep.subr.mxu0 0.0
        %773 = vmatpush1.xpose.msra.mxu0 0.0
        %774 = vmatprep.subr.mxu0 0.0
        %775 = vmatpush1.xpose.msra.mxu0 0.0
        %776 = vmatprep.subr.mxu0 0.0
        %777 = vmatpush1.xpose.msra.mxu0 0.0
        %778 = vmatprep.subr.mxu0 0.0
        %779 = vmatpush1.xpose.msra.mxu0 0.0
        %780 = vmatprep.mubr.f32.mxu0 0.0
        %781 = vmatmul.mubr.f32.gmra.mrb[0].mxu0 %v275
        %v782 = vpop.f32.mrb[0].mxu0
        %v783 = vadd.f32 0.0, %v782
        %v784 = vpop.f32.mrb[0].mxu0
        %785 = vmatprep.mubr.f32.mxu0 0.0
        %786 = vmatmul.mubr.f32.gmra.mrb[0].mxu0 %v278
        %v787 = vpop.f32.mrb[0].mxu0
        %v788 = vadd.f32 0.0, %v787
        %v789 = vpop.f32.mrb[0].mxu0
        %790 = vdwg.mxu0
        %791 = vst.msk [vmem:[#allocation2 + $0x28] sm:$0xff] %vm273, %v783
        %792 = vst.msk [vmem:[#allocation2 + $0x68] sm:$0xff] %vm273, %v788
        %s793 = scalar_lea.vmem [#allocation3], 96
        %v794 = vld [vmem:[%s793] sm:$0xff]
        %v795 = vld [vmem:[%s793 + $0x8] sm:$0xff]
        %v797 = vsel %vm273, %v794, 0
        %v800 = vsel %vm273, %v795, 0
        %802 = vmatprep.subr.mxu0 0.0
        %803 = vmatpush1.xpose.msra.mxu0 %v797
        %804 = vmatprep.subr.mxu0 0.0
        %805 = vmatpush1.xpose.msra.mxu0 %v800
        %806 = vmatprep.subr.mxu0 0.0
        %807 = vmatpush1.xpose.msra.mxu0 0.0
        %808 = vmatprep.subr.mxu0 0.0
        %809 = vmatpush1.xpose.msra.mxu0 0.0
        %810 = vmatprep.subr.mxu0 0.0
        %811 = vmatpush1.xpose.msra.mxu0 0.0
        %812 = vmatprep.subr.mxu0 0.0
        %813 = vmatpush1.xpose.msra.mxu0 0.0
        %814 = vmatprep.subr.mxu0 0.0
        %815 = vmatpush1.xpose.msra.mxu0 0.0
        %816 = vmatprep.subr.mxu0 0.0
        %817 = vmatpush1.xpose.msra.mxu0 0.0
        %818 = vmatprep.subr.mxu0 0.0
        %819 = vmatpush1.xpose.msra.mxu0 0.0
        %820 = vmatprep.subr.mxu0 0.0
        %821 = vmatpush1.xpose.msra.mxu0 0.0
        %822 = vmatprep.subr.mxu0 0.0
        %823 = vmatpush1.xpose.msra.mxu0 0.0
        %824 = vmatprep.subr.mxu0 0.0
        %825 = vmatpush1.xpose.msra.mxu0 0.0
        %826 = vmatprep.subr.mxu0 0.0
        %827 = vmatpush1.xpose.msra.mxu0 0.0
        %828 = vmatprep.subr.mxu0 0.0
        %829 = vmatpush1.xpose.msra.mxu0 0.0
        %830 = vmatprep.subr.mxu0 0.0
        %831 = vmatpush1.xpose.msra.mxu0 0.0
        %832 = vmatprep.subr.mxu0 0.0
        %833 = vmatpush1.xpose.msra.mxu0 0.0
        %834 = vmatprep.subr.mxu0 0.0
        %835 = vmatpush1.xpose.msra.mxu0 0.0
        %836 = vmatprep.subr.mxu0 0.0
        %837 = vmatpush1.xpose.msra.mxu0 0.0
        %838 = vmatprep.subr.mxu0 0.0
        %839 = vmatpush1.xpose.msra.mxu0 0.0
        %840 = vmatprep.subr.mxu0 0.0
        %841 = vmatpush1.xpose.msra.mxu0 0.0
        %842 = vmatprep.subr.mxu0 0.0
        %843 = vmatpush1.xpose.msra.mxu0 0.0
        %844 = vmatprep.subr.mxu0 0.0
        %845 = vmatpush1.xpose.msra.mxu0 0.0
        %846 = vmatprep.subr.mxu0 0.0
        %847 = vmatpush1.xpose.msra.mxu0 0.0
        %848 = vmatprep.subr.mxu0 0.0
        %849 = vmatpush1.xpose.msra.mxu0 0.0
        %850 = vmatprep.subr.mxu0 0.0
        %851 = vmatpush1.xpose.msra.mxu0 0.0
        %852 = vmatprep.subr.mxu0 0.0
        %853 = vmatpush1.xpose.msra.mxu0 0.0
        %854 = vmatprep.subr.mxu0 0.0
        %855 = vmatpush1.xpose.msra.mxu0 0.0
        %856 = vmatprep.subr.mxu0 0.0
        %857 = vmatpush1.xpose.msra.mxu0 0.0
        %858 = vmatprep.subr.mxu0 0.0
        %859 = vmatpush1.xpose.msra.mxu0 0.0
        %860 = vmatprep.subr.mxu0 0.0
        %861 = vmatpush1.xpose.msra.mxu0 0.0
        %862 = vmatprep.subr.mxu0 0.0
        %863 = vmatpush1.xpose.msra.mxu0 0.0
        %864 = vmatprep.subr.mxu0 0.0
        %865 = vmatpush1.xpose.msra.mxu0 0.0
        %866 = vmatprep.mubr.f32.mxu0 0.0
        %867 = vmatmul.mubr.f32.gmra.mrb[0].mxu0 %v275
        %v868 = vpop.f32.mrb[0].mxu0
        %v869 = vadd.f32 0.0, %v868
        %v870 = vpop.f32.mrb[0].mxu0
        %871 = vmatprep.mubr.f32.mxu0 0.0
        %872 = vmatmul.mubr.f32.gmra.mrb[0].mxu0 %v278
        %v873 = vpop.f32.mrb[0].mxu0
        %v874 = vadd.f32 0.0, %v873
        %v875 = vpop.f32.mrb[0].mxu0
        %876 = vdwg.mxu0
        %877 = vst.msk [vmem:[#allocation2 + $0x30] sm:$0xff] %vm273, %v869
        %878 = vst.msk [vmem:[#allocation2 + $0x70] sm:$0xff] %vm273, %v874
        %s879 = scalar_lea.vmem [#allocation3], 112
        %v880 = vld [vmem:[%s879] sm:$0xff]
        %v881 = vld [vmem:[%s879 + $0x8] sm:$0xff]
        %v883 = vsel %vm273, %v880, 0
        %v886 = vsel %vm273, %v881, 0
        %888 = vmatprep.subr.mxu0 0.0
        %889 = vmatpush1.xpose.msra.mxu0 %v883
        %890 = vmatprep.subr.mxu0 0.0
        %891 = vmatpush1.xpose.msra.mxu0 %v886
        %892 = vmatprep.subr.mxu0 0.0
        %893 = vmatpush1.xpose.msra.mxu0 0.0
        %894 = vmatprep.subr.mxu0 0.0
        %895 = vmatpush1.xpose.msra.mxu0 0.0
        %896 = vmatprep.subr.mxu0 0.0
        %897 = vmatpush1.xpose.msra.mxu0 0.0
        %898 = vmatprep.subr.mxu0 0.0
        %899 = vmatpush1.xpose.msra.mxu0 0.0
        %900 = vmatprep.subr.mxu0 0.0
        %901 = vmatpush1.xpose.msra.mxu0 0.0
        %902 = vmatprep.subr.mxu0 0.0
        %903 = vmatpush1.xpose.msra.mxu0 0.0
        %904 = vmatprep.subr.mxu0 0.0
        %905 = vmatpush1.xpose.msra.mxu0 0.0
        %906 = vmatprep.subr.mxu0 0.0
        %907 = vmatpush1.xpose.msra.mxu0 0.0
        %908 = vmatprep.subr.mxu0 0.0
        %909 = vmatpush1.xpose.msra.mxu0 0.0
        %910 = vmatprep.subr.mxu0 0.0
        %911 = vmatpush1.xpose.msra.mxu0 0.0
        %912 = vmatprep.subr.mxu0 0.0
        %913 = vmatpush1.xpose.msra.mxu0 0.0
        %914 = vmatprep.subr.mxu0 0.0
        %915 = vmatpush1.xpose.msra.mxu0 0.0
        %916 = vmatprep.subr.mxu0 0.0
        %917 = vmatpush1.xpose.msra.mxu0 0.0
        %918 = vmatprep.subr.mxu0 0.0
        %919 = vmatpush1.xpose.msra.mxu0 0.0
        %920 = vmatprep.subr.mxu0 0.0
        %921 = vmatpush1.xpose.msra.mxu0 0.0
        %922 = vmatprep.subr.mxu0 0.0
        %923 = vmatpush1.xpose.msra.mxu0 0.0
        %924 = vmatprep.subr.mxu0 0.0
        %925 = vmatpush1.xpose.msra.mxu0 0.0
        %926 = vmatprep.subr.mxu0 0.0
        %927 = vmatpush1.xpose.msra.mxu0 0.0
        %928 = vmatprep.subr.mxu0 0.0
        %929 = vmatpush1.xpose.msra.mxu0 0.0
        %930 = vmatprep.subr.mxu0 0.0
        %931 = vmatpush1.xpose.msra.mxu0 0.0
        %932 = vmatprep.subr.mxu0 0.0
        %933 = vmatpush1.xpose.msra.mxu0 0.0
        %934 = vmatprep.subr.mxu0 0.0
        %935 = vmatpush1.xpose.msra.mxu0 0.0
        %936 = vmatprep.subr.mxu0 0.0
        %937 = vmatpush1.xpose.msra.mxu0 0.0
        %938 = vmatprep.subr.mxu0 0.0
        %939 = vmatpush1.xpose.msra.mxu0 0.0
        %940 = vmatprep.subr.mxu0 0.0
        %941 = vmatpush1.xpose.msra.mxu0 0.0
        %942 = vmatprep.subr.mxu0 0.0
        %943 = vmatpush1.xpose.msra.mxu0 0.0
        %944 = vmatprep.subr.mxu0 0.0
        %945 = vmatpush1.xpose.msra.mxu0 0.0
        %946 = vmatprep.subr.mxu0 0.0
        %947 = vmatpush1.xpose.msra.mxu0 0.0
        %948 = vmatprep.subr.mxu0 0.0
        %949 = vmatpush1.xpose.msra.mxu0 0.0
        %950 = vmatprep.subr.mxu0 0.0
        %951 = vmatpush1.xpose.msra.mxu0 0.0
        %952 = vmatprep.mubr.f32.mxu0 0.0
        %953 = vmatmul.mubr.f32.gmra.mrb[0].mxu0 %v275
        %v954 = vpop.f32.mrb[0].mxu0
        %v955 = vadd.f32 0.0, %v954
        %v956 = vpop.f32.mrb[0].mxu0
        %957 = vmatprep.mubr.f32.mxu0 0.0
        %958 = vmatmul.mubr.f32.gmra.mrb[0].mxu0 %v278
        %v959 = vpop.f32.mrb[0].mxu0
        %v960 = vadd.f32 0.0, %v959
        %v961 = vpop.f32.mrb[0].mxu0
        %962 = vdwg.mxu0
        %963 = vst.msk [vmem:[#allocation2 + $0x38] sm:$0xff] %vm273, %v955
        %964 = vst.msk [vmem:[#allocation2 + $0x78] sm:$0xff] %vm273, %v960
        %v965 = vld [vmem:[#allocation2] ss:$8 sm:$0xf]
        %v966 = vld [vmem:[#allocation2] ss:$8 sm:$0xf0]
        %v967 = vor.u32 %v965, %v966
        %s968 = scalar_lea.vmem [#allocation2], 64
        %v969 = vld [vmem:[%s968] ss:$8 sm:$0xf]
        %v970 = vld [vmem:[%s968] ss:$8 sm:$0xf0]
        %v971 = vor.u32 %v969, %v970
        %v972 = vld [vmem:[%s237] sm:$0xff]
        %v973 = vld [vmem:[%s237 + $0x8] sm:$0xff]
        %v975 = vsel %vm273, %v967, 0
        %v978 = vsel %vm273, %v971, 0
        %980 = vmatprep.subr.mxu0 0.0
        %981 = vmatpush1.msra.mxu0 %v972
        %982 = vmatprep.subr.mxu0 0.0
        %983 = vmatpush1.msra.mxu0 %v973
        %984 = vmatprep.subr.mxu0 0.0
        %985 = vmatpush1.msra.mxu0 0.0
        %986 = vmatprep.subr.mxu0 0.0
        %987 = vmatpush1.msra.mxu0 0.0
        %988 = vmatprep.subr.mxu0 0.0
        %989 = vmatpush1.msra.mxu0 0.0
        %990 = vmatprep.subr.mxu0 0.0
        %991 = vmatpush1.msra.mxu0 0.0
        %992 = vmatprep.subr.mxu0 0.0
        %993 = vmatpush1.msra.mxu0 0.0
        %994 = vmatprep.subr.mxu0 0.0
        %995 = vmatpush1.msra.mxu0 0.0
        %996 = vmatprep.subr.mxu0 0.0
        %997 = vmatpush1.msra.mxu0 0.0
        %998 = vmatprep.subr.mxu0 0.0
        %999 = vmatpush1.msra.mxu0 0.0
        %1000 = vmatprep.subr.mxu0 0.0
        %1001 = vmatpush1.msra.mxu0 0.0
        %1002 = vmatprep.subr.mxu0 0.0
        %1003 = vmatpush1.msra.mxu0 0.0
        %1004 = vmatprep.subr.mxu0 0.0
        %1005 = vmatpush1.msra.mxu0 0.0
        %1006 = vmatprep.subr.mxu0 0.0
        %1007 = vmatpush1.msra.mxu0 0.0
        %1008 = vmatprep.subr.mxu0 0.0
        %1009 = vmatpush1.msra.mxu0 0.0
        %1010 = vmatprep.subr.mxu0 0.0
        %1011 = vmatpush1.msra.mxu0 0.0
        %1012 = vmatprep.subr.mxu0 0.0
        %1013 = vmatpush1.msra.mxu0 0.0
        %1014 = vmatprep.subr.mxu0 0.0
        %1015 = vmatpush1.msra.mxu0 0.0
        %1016 = vmatprep.subr.mxu0 0.0
        %1017 = vmatpush1.msra.mxu0 0.0
        %1018 = vmatprep.subr.mxu0 0.0
        %1019 = vmatpush1.msra.mxu0 0.0
        %1020 = vmatprep.subr.mxu0 0.0
        %1021 = vmatpush1.msra.mxu0 0.0
        %1022 = vmatprep.subr.mxu0 0.0
        %1023 = vmatpush1.msra.mxu0 0.0
        %1024 = vmatprep.subr.mxu0 0.0
        %1025 = vmatpush1.msra.mxu0 0.0
        %1026 = vmatprep.subr.mxu0 0.0
        %1027 = vmatpush1.msra.mxu0 0.0
        %1028 = vmatprep.subr.mxu0 0.0
        %1029 = vmatpush1.msra.mxu0 0.0
        %1030 = vmatprep.subr.mxu0 0.0
        %1031 = vmatpush1.msra.mxu0 0.0
        %1032 = vmatprep.subr.mxu0 0.0
        %1033 = vmatpush1.msra.mxu0 0.0
        %1034 = vmatprep.subr.mxu0 0.0
        %1035 = vmatpush1.msra.mxu0 0.0
        %1036 = vmatprep.subr.mxu0 0.0
        %1037 = vmatpush1.msra.mxu0 0.0
        %1038 = vmatprep.subr.mxu0 0.0
        %1039 = vmatpush1.msra.mxu0 0.0
        %1040 = vmatprep.subr.mxu0 0.0
        %1041 = vmatpush1.msra.mxu0 0.0
        %1042 = vmatprep.subr.mxu0 0.0
        %1043 = vmatpush1.msra.mxu0 0.0
        %1044 = vmatprep.mubr.f32.mxu0 0.0
        %1045 = vmatmul.mubr.f32.gmra.mrb[0].mxu0 %v975
        %v1046 = vpop.f32.mrb[0].mxu0
        %v1047 = vadd.f32 0.0, %v1046
        %v1048 = vpop.f32.mrb[0].mxu0
        %1049 = vmatprep.mubr.f32.mxu0 0.0
        %1050 = vmatmul.mubr.f32.gmra.mrb[0].mxu0 %v978
        %v1051 = vpop.f32.mrb[0].mxu0
        %v1052 = vadd.f32 0.0, %v1051
        %v1053 = vpop.f32.mrb[0].mxu0
        %1054 = vdwg.mxu0
        %1055 = vst [vmem:[%s264] sm:$0xff] %v1047
        %1056 = vst [vmem:[%s264 + $0x8] sm:$0xff] %v1052
        %s1057 = scalar_lea.vmem [#allocation2], 1
        %v1058 = vld [vmem:[%s1057] ss:$8 sm:$0xf]
        %v1059 = vld [vmem:[%s1057] ss:$8 sm:$0xf0]
        %v1060 = vor.u32 %v1058, %v1059
        %s1061 = scalar_lea.vmem [#allocation2], 65
        %v1062 = vld [vmem:[%s1061] ss:$8 sm:$0xf]
        %v1063 = vld [vmem:[%s1061] ss:$8 sm:$0xf0]
        %v1064 = vor.u32 %v1062, %v1063
        %s1065 = scalar_lea.vmem %s237, 16 [#allocation8]
        %v1066 = vld [vmem:[%s1065] sm:$0xff]
        %v1067 = vld [vmem:[%s1065 + $0x8] sm:$0xff]
        %v1069 = vsel %vm273, %v1060, 0
        %v1072 = vsel %vm273, %v1064, 0
        %1074 = vmatprep.subr.mxu0 0.0
        %1075 = vmatpush1.msra.mxu0 %v1066
        %1076 = vmatprep.subr.mxu0 0.0
        %1077 = vmatpush1.msra.mxu0 %v1067
        %1078 = vmatprep.subr.mxu0 0.0
        %1079 = vmatpush1.msra.mxu0 0.0
        %1080 = vmatprep.subr.mxu0 0.0
        %1081 = vmatpush1.msra.mxu0 0.0
        %1082 = vmatprep.subr.mxu0 0.0
        %1083 = vmatpush1.msra.mxu0 0.0
        %1084 = vmatprep.subr.mxu0 0.0
        %1085 = vmatpush1.msra.mxu0 0.0
        %1086 = vmatprep.subr.mxu0 0.0
        %1087 = vmatpush1.msra.mxu0 0.0
        %1088 = vmatprep.subr.mxu0 0.0
        %1089 = vmatpush1.msra.mxu0 0.0
        %1090 = vmatprep.subr.mxu0 0.0
        %1091 = vmatpush1.msra.mxu0 0.0
        %1092 = vmatprep.subr.mxu0 0.0
        %1093 = vmatpush1.msra.mxu0 0.0
        %1094 = vmatprep.subr.mxu0 0.0
        %1095 = vmatpush1.msra.mxu0 0.0
        %1096 = vmatprep.subr.mxu0 0.0
        %1097 = vmatpush1.msra.mxu0 0.0
        %1098 = vmatprep.subr.mxu0 0.0
        %1099 = vmatpush1.msra.mxu0 0.0
        %1100 = vmatprep.subr.mxu0 0.0
        %1101 = vmatpush1.msra.mxu0 0.0
        %1102 = vmatprep.subr.mxu0 0.0
        %1103 = vmatpush1.msra.mxu0 0.0
        %1104 = vmatprep.subr.mxu0 0.0
        %1105 = vmatpush1.msra.mxu0 0.0
        %1106 = vmatprep.subr.mxu0 0.0
        %1107 = vmatpush1.msra.mxu0 0.0
        %1108 = vmatprep.subr.mxu0 0.0
        %1109 = vmatpush1.msra.mxu0 0.0
        %1110 = vmatprep.subr.mxu0 0.0
        %1111 = vmatpush1.msra.mxu0 0.0
        %1112 = vmatprep.subr.mxu0 0.0
        %1113 = vmatpush1.msra.mxu0 0.0
        %1114 = vmatprep.subr.mxu0 0.0
        %1115 = vmatpush1.msra.mxu0 0.0
        %1116 = vmatprep.subr.mxu0 0.0
        %1117 = vmatpush1.msra.mxu0 0.0
        %1118 = vmatprep.subr.mxu0 0.0
        %1119 = vmatpush1.msra.mxu0 0.0
        %1120 = vmatprep.subr.mxu0 0.0
        %1121 = vmatpush1.msra.mxu0 0.0
        %1122 = vmatprep.subr.mxu0 0.0
        %1123 = vmatpush1.msra.mxu0 0.0
        %1124 = vmatprep.subr.mxu0 0.0
        %1125 = vmatpush1.msra.mxu0 0.0
        %1126 = vmatprep.subr.mxu0 0.0
        %1127 = vmatpush1.msra.mxu0 0.0
        %1128 = vmatprep.subr.mxu0 0.0
        %1129 = vmatpush1.msra.mxu0 0.0
        %1130 = vmatprep.subr.mxu0 0.0
        %1131 = vmatpush1.msra.mxu0 0.0
        %1132 = vmatprep.subr.mxu0 0.0
        %1133 = vmatpush1.msra.mxu0 0.0
        %1134 = vmatprep.subr.mxu0 0.0
        %1135 = vmatpush1.msra.mxu0 0.0
        %1136 = vmatprep.subr.mxu0 0.0
        %1137 = vmatpush1.msra.mxu0 0.0
        %1138 = vmatprep.mubr.f32.mxu0 0.0
        %1139 = vmatmul.mubr.f32.gmra.mrb[0].mxu0 %v1069
        %v1140 = vpop.f32.mrb[0].mxu0
        %v1141 = vadd.f32 0.0, %v1140
        %v1142 = vpop.f32.mrb[0].mxu0
        %1143 = vmatprep.mubr.f32.mxu0 0.0
        %1144 = vmatmul.mubr.f32.gmra.mrb[0].mxu0 %v1072
        %v1145 = vpop.f32.mrb[0].mxu0
        %v1146 = vadd.f32 0.0, %v1145
        %v1147 = vpop.f32.mrb[0].mxu0
        %1148 = vdwg.mxu0
        %s1149 = scalar_lea.vmem %s264, 16 [#allocation9]
        %1150 = vst [vmem:[%s1149] sm:$0xff] %v1141
        %1151 = vst [vmem:[%s1149 + $0x8] sm:$0xff] %v1146
        %s1152 = scalar_lea.vmem [#allocation2], 2
        %v1153 = vld [vmem:[%s1152] ss:$8 sm:$0xf]
        %v1154 = vld [vmem:[%s1152] ss:$8 sm:$0xf0]
        %v1155 = vor.u32 %v1153, %v1154
        %s1156 = scalar_lea.vmem [#allocation2], 66
        %v1157 = vld [vmem:[%s1156] ss:$8 sm:$0xf]
        %v1158 = vld [vmem:[%s1156] ss:$8 sm:$0xf0]
        %v1159 = vor.u32 %v1157, %v1158
        %s1160 = scalar_lea.vmem %s237, 32 [#allocation8]
        %v1161 = vld [vmem:[%s1160] sm:$0xff]
        %v1162 = vld [vmem:[%s1160 + $0x8] sm:$0xff]
        %v1164 = vsel %vm273, %v1155, 0
        %v1167 = vsel %vm273, %v1159, 0
        %1169 = vmatprep.subr.mxu0 0.0
        %1170 = vmatpush1.msra.mxu0 %v1161
        %1171 = vmatprep.subr.mxu0 0.0
        %1172 = vmatpush1.msra.mxu0 %v1162
        %1173 = vmatprep.subr.mxu0 0.0
        %1174 = vmatpush1.msra.mxu0 0.0
        %1175 = vmatprep.subr.mxu0 0.0
        %1176 = vmatpush1.msra.mxu0 0.0
        %1177 = vmatprep.subr.mxu0 0.0
        %1178 = vmatpush1.msra.mxu0 0.0
        %1179 = vmatprep.subr.mxu0 0.0
        %1180 = vmatpush1.msra.mxu0 0.0
        %1181 = vmatprep.subr.mxu0 0.0
        %1182 = vmatpush1.msra.mxu0 0.0
        %1183 = vmatprep.subr.mxu0 0.0
        %1184 = vmatpush1.msra.mxu0 0.0
        %1185 = vmatprep.subr.mxu0 0.0
        %1186 = vmatpush1.msra.mxu0 0.0
        %1187 = vmatprep.subr.mxu0 0.0
        %1188 = vmatpush1.msra.mxu0 0.0
        %1189 = vmatprep.subr.mxu0 0.0
        %1190 = vmatpush1.msra.mxu0 0.0
        %1191 = vmatprep.subr.mxu0 0.0
        %1192 = vmatpush1.msra.mxu0 0.0
        %1193 = vmatprep.subr.mxu0 0.0
        %1194 = vmatpush1.msra.mxu0 0.0
        %1195 = vmatprep.subr.mxu0 0.0
        %1196 = vmatpush1.msra.mxu0 0.0
        %1197 = vmatprep.subr.mxu0 0.0
        %1198 = vmatpush1.msra.mxu0 0.0
        %1199 = vmatprep.subr.mxu0 0.0
        %1200 = vmatpush1.msra.mxu0 0.0
        %1201 = vmatprep.subr.mxu0 0.0
        %1202 = vmatpush1.msra.mxu0 0.0
        %1203 = vmatprep.subr.mxu0 0.0
        %1204 = vmatpush1.msra.mxu0 0.0
        %1205 = vmatprep.subr.mxu0 0.0
        %1206 = vmatpush1.msra.mxu0 0.0
        %1207 = vmatprep.subr.mxu0 0.0
        %1208 = vmatpush1.msra.mxu0 0.0
        %1209 = vmatprep.subr.mxu0 0.0
        %1210 = vmatpush1.msra.mxu0 0.0
        %1211 = vmatprep.subr.mxu0 0.0
        %1212 = vmatpush1.msra.mxu0 0.0
        %1213 = vmatprep.subr.mxu0 0.0
        %1214 = vmatpush1.msra.mxu0 0.0
        %1215 = vmatprep.subr.mxu0 0.0
        %1216 = vmatpush1.msra.mxu0 0.0
        %1217 = vmatprep.subr.mxu0 0.0
        %1218 = vmatpush1.msra.mxu0 0.0
        %1219 = vmatprep.subr.mxu0 0.0
        %1220 = vmatpush1.msra.mxu0 0.0
        %1221 = vmatprep.subr.mxu0 0.0
        %1222 = vmatpush1.msra.mxu0 0.0
        %1223 = vmatprep.subr.mxu0 0.0
        %1224 = vmatpush1.msra.mxu0 0.0
        %1225 = vmatprep.subr.mxu0 0.0
        %1226 = vmatpush1.msra.mxu0 0.0
        %1227 = vmatprep.subr.mxu0 0.0
        %1228 = vmatpush1.msra.mxu0 0.0
        %1229 = vmatprep.subr.mxu0 0.0
        %1230 = vmatpush1.msra.mxu0 0.0
        %1231 = vmatprep.subr.mxu0 0.0
        %1232 = vmatpush1.msra.mxu0 0.0
        %1233 = vmatprep.mubr.f32.mxu0 0.0
        %1234 = vmatmul.mubr.f32.gmra.mrb[0].mxu0 %v1164
        %v1235 = vpop.f32.mrb[0].mxu0
        %v1236 = vadd.f32 0.0, %v1235
        %v1237 = vpop.f32.mrb[0].mxu0
        %1238 = vmatprep.mubr.f32.mxu0 0.0
        %1239 = vmatmul.mubr.f32.gmra.mrb[0].mxu0 %v1167
        %v1240 = vpop.f32.mrb[0].mxu0
        %v1241 = vadd.f32 0.0, %v1240
        %v1242 = vpop.f32.mrb[0].mxu0
        %1243 = vdwg.mxu0
        %s1244 = scalar_lea.vmem %s264, 32 [#allocation9]
        %1245 = vst [vmem:[%s1244] sm:$0xff] %v1236
        %1246 = vst [vmem:[%s1244 + $0x8] sm:$0xff] %v1241
        %s1247 = scalar_lea.vmem [#allocation2], 3
        %v1248 = vld [vmem:[%s1247] ss:$8 sm:$0xf]
        %v1249 = vld [vmem:[%s1247] ss:$8 sm:$0xf0]
        %v1250 = vor.u32 %v1248, %v1249
        %s1251 = scalar_lea.vmem [#allocation2], 67
        %v1252 = vld [vmem:[%s1251] ss:$8 sm:$0xf]
        %v1253 = vld [vmem:[%s1251] ss:$8 sm:$0xf0]
        %v1254 = vor.u32 %v1252, %v1253
        %s1255 = scalar_lea.vmem %s237, 48 [#allocation8]
        %v1256 = vld [vmem:[%s1255] sm:$0xff]
        %v1257 = vld [vmem:[%s1255 + $0x8] sm:$0xff]
        %v1259 = vsel %vm273, %v1250, 0
        %v1262 = vsel %vm273, %v1254, 0
        %1264 = vmatprep.subr.mxu0 0.0
        %1265 = vmatpush1.msra.mxu0 %v1256
        %1266 = vmatprep.subr.mxu0 0.0
        %1267 = vmatpush1.msra.mxu0 %v1257
        %1268 = vmatprep.subr.mxu0 0.0
        %1269 = vmatpush1.msra.mxu0 0.0
        %1270 = vmatprep.subr.mxu0 0.0
        %1271 = vmatpush1.msra.mxu0 0.0
        %1272 = vmatprep.subr.mxu0 0.0
        %1273 = vmatpush1.msra.mxu0 0.0
        %1274 = vmatprep.subr.mxu0 0.0
        %1275 = vmatpush1.msra.mxu0 0.0
        %1276 = vmatprep.subr.mxu0 0.0
        %1277 = vmatpush1.msra.mxu0 0.0
        %1278 = vmatprep.subr.mxu0 0.0
        %1279 = vmatpush1.msra.mxu0 0.0
        %1280 = vmatprep.subr.mxu0 0.0
        %1281 = vmatpush1.msra.mxu0 0.0
        %1282 = vmatprep.subr.mxu0 0.0
        %1283 = vmatpush1.msra.mxu0 0.0
        %1284 = vmatprep.subr.mxu0 0.0
        %1285 = vmatpush1.msra.mxu0 0.0
        %1286 = vmatprep.subr.mxu0 0.0
        %1287 = vmatpush1.msra.mxu0 0.0
        %1288 = vmatprep.subr.mxu0 0.0
        %1289 = vmatpush1.msra.mxu0 0.0
        %1290 = vmatprep.subr.mxu0 0.0
        %1291 = vmatpush1.msra.mxu0 0.0
        %1292 = vmatprep.subr.mxu0 0.0
        %1293 = vmatpush1.msra.mxu0 0.0
        %1294 = vmatprep.subr.mxu0 0.0
        %1295 = vmatpush1.msra.mxu0 0.0
        %1296 = vmatprep.subr.mxu0 0.0
        %1297 = vmatpush1.msra.mxu0 0.0
        %1298 = vmatprep.subr.mxu0 0.0
        %1299 = vmatpush1.msra.mxu0 0.0
        %1300 = vmatprep.subr.mxu0 0.0
        %1301 = vmatpush1.msra.mxu0 0.0
        %1302 = vmatprep.subr.mxu0 0.0
        %1303 = vmatpush1.msra.mxu0 0.0
        %1304 = vmatprep.subr.mxu0 0.0
        %1305 = vmatpush1.msra.mxu0 0.0
        %1306 = vmatprep.subr.mxu0 0.0
        %1307 = vmatpush1.msra.mxu0 0.0
        %1308 = vmatprep.subr.mxu0 0.0
        %1309 = vmatpush1.msra.mxu0 0.0
        %1310 = vmatprep.subr.mxu0 0.0
        %1311 = vmatpush1.msra.mxu0 0.0
        %1312 = vmatprep.subr.mxu0 0.0
        %1313 = vmatpush1.msra.mxu0 0.0
        %1314 = vmatprep.subr.mxu0 0.0
        %1315 = vmatpush1.msra.mxu0 0.0
        %1316 = vmatprep.subr.mxu0 0.0
        %1317 = vmatpush1.msra.mxu0 0.0
        %1318 = vmatprep.subr.mxu0 0.0
        %1319 = vmatpush1.msra.mxu0 0.0
        %1320 = vmatprep.subr.mxu0 0.0
        %1321 = vmatpush1.msra.mxu0 0.0
        %1322 = vmatprep.subr.mxu0 0.0
        %1323 = vmatpush1.msra.mxu0 0.0
        %1324 = vmatprep.subr.mxu0 0.0
        %1325 = vmatpush1.msra.mxu0 0.0
        %1326 = vmatprep.subr.mxu0 0.0
        %1327 = vmatpush1.msra.mxu0 0.0
        %1328 = vmatprep.mubr.f32.mxu0 0.0
        %1329 = vmatmul.mubr.f32.gmra.mrb[0].mxu0 %v1259
        %v1330 = vpop.f32.mrb[0].mxu0
        %v1331 = vadd.f32 0.0, %v1330
        %v1332 = vpop.f32.mrb[0].mxu0
        %1333 = vmatprep.mubr.f32.mxu0 0.0
        %1334 = vmatmul.mubr.f32.gmra.mrb[0].mxu0 %v1262
        %v1335 = vpop.f32.mrb[0].mxu0
        %v1336 = vadd.f32 0.0, %v1335
        %v1337 = vpop.f32.mrb[0].mxu0
        %1338 = vdwg.mxu0
        %s1339 = scalar_lea.vmem %s264, 48 [#allocation9]
        %1340 = vst [vmem:[%s1339] sm:$0xff] %v1331
        %1341 = vst [vmem:[%s1339 + $0x8] sm:$0xff] %v1336
        %s1342 = scalar_lea.vmem [#allocation2], 4
        %v1343 = vld [vmem:[%s1342] ss:$8 sm:$0xf]
        %v1344 = vld [vmem:[%s1342] ss:$8 sm:$0xf0]
        %v1345 = vor.u32 %v1343, %v1344
        %s1346 = scalar_lea.vmem [#allocation2], 68
        %v1347 = vld [vmem:[%s1346] ss:$8 sm:$0xf]
        %v1348 = vld [vmem:[%s1346] ss:$8 sm:$0xf0]
        %v1349 = vor.u32 %v1347, %v1348
        %s1350 = scalar_lea.vmem %s237, 64 [#allocation8]
        %v1351 = vld [vmem:[%s1350] sm:$0xff]
        %v1352 = vld [vmem:[%s1350 + $0x8] sm:$0xff]
        %v1354 = vsel %vm273, %v1345, 0
        %v1357 = vsel %vm273, %v1349, 0
        %1359 = vmatprep.subr.mxu0 0.0
        %1360 = vmatpush1.msra.mxu0 %v1351
        %1361 = vmatprep.subr.mxu0 0.0
        %1362 = vmatpush1.msra.mxu0 %v1352
        %1363 = vmatprep.subr.mxu0 0.0
        %1364 = vmatpush1.msra.mxu0 0.0
        %1365 = vmatprep.subr.mxu0 0.0
        %1366 = vmatpush1.msra.mxu0 0.0
        %1367 = vmatprep.subr.mxu0 0.0
        %1368 = vmatpush1.msra.mxu0 0.0
        %1369 = vmatprep.subr.mxu0 0.0
        %1370 = vmatpush1.msra.mxu0 0.0
        %1371 = vmatprep.subr.mxu0 0.0
        %1372 = vmatpush1.msra.mxu0 0.0
        %1373 = vmatprep.subr.mxu0 0.0
        %1374 = vmatpush1.msra.mxu0 0.0
        %1375 = vmatprep.subr.mxu0 0.0
        %1376 = vmatpush1.msra.mxu0 0.0
        %1377 = vmatprep.subr.mxu0 0.0
        %1378 = vmatpush1.msra.mxu0 0.0
        %1379 = vmatprep.subr.mxu0 0.0
        %1380 = vmatpush1.msra.mxu0 0.0
        %1381 = vmatprep.subr.mxu0 0.0
        %1382 = vmatpush1.msra.mxu0 0.0
        %1383 = vmatprep.subr.mxu0 0.0
        %1384 = vmatpush1.msra.mxu0 0.0
        %1385 = vmatprep.subr.mxu0 0.0
        %1386 = vmatpush1.msra.mxu0 0.0
        %1387 = vmatprep.subr.mxu0 0.0
        %1388 = vmatpush1.msra.mxu0 0.0
        %1389 = vmatprep.subr.mxu0 0.0
        %1390 = vmatpush1.msra.mxu0 0.0
        %1391 = vmatprep.subr.mxu0 0.0
        %1392 = vmatpush1.msra.mxu0 0.0
        %1393 = vmatprep.subr.mxu0 0.0
        %1394 = vmatpush1.msra.mxu0 0.0
        %1395 = vmatprep.subr.mxu0 0.0
        %1396 = vmatpush1.msra.mxu0 0.0
        %1397 = vmatprep.subr.mxu0 0.0
        %1398 = vmatpush1.msra.mxu0 0.0
        %1399 = vmatprep.subr.mxu0 0.0
        %1400 = vmatpush1.msra.mxu0 0.0
        %1401 = vmatprep.subr.mxu0 0.0
        %1402 = vmatpush1.msra.mxu0 0.0
        %1403 = vmatprep.subr.mxu0 0.0
        %1404 = vmatpush1.msra.mxu0 0.0
        %1405 = vmatprep.subr.mxu0 0.0
        %1406 = vmatpush1.msra.mxu0 0.0
        %1407 = vmatprep.subr.mxu0 0.0
        %1408 = vmatpush1.msra.mxu0 0.0
        %1409 = vmatprep.subr.mxu0 0.0
        %1410 = vmatpush1.msra.mxu0 0.0
        %1411 = vmatprep.subr.mxu0 0.0
        %1412 = vmatpush1.msra.mxu0 0.0
        %1413 = vmatprep.subr.mxu0 0.0
        %1414 = vmatpush1.msra.mxu0 0.0
        %1415 = vmatprep.subr.mxu0 0.0
        %1416 = vmatpush1.msra.mxu0 0.0
        %1417 = vmatprep.subr.mxu0 0.0
        %1418 = vmatpush1.msra.mxu0 0.0
        %1419 = vmatprep.subr.mxu0 0.0
        %1420 = vmatpush1.msra.mxu0 0.0
        %1421 = vmatprep.subr.mxu0 0.0
        %1422 = vmatpush1.msra.mxu0 0.0
        %1423 = vmatprep.mubr.f32.mxu0 0.0
        %1424 = vmatmul.mubr.f32.gmra.mrb[0].mxu0 %v1354
        %v1425 = vpop.f32.mrb[0].mxu0
        %v1426 = vadd.f32 0.0, %v1425
        %v1427 = vpop.f32.mrb[0].mxu0
        %1428 = vmatprep.mubr.f32.mxu0 0.0
        %1429 = vmatmul.mubr.f32.gmra.mrb[0].mxu0 %v1357
        %v1430 = vpop.f32.mrb[0].mxu0
        %v1431 = vadd.f32 0.0, %v1430
        %v1432 = vpop.f32.mrb[0].mxu0
        %1433 = vdwg.mxu0
        %s1434 = scalar_lea.vmem %s264, 64 [#allocation9]
        %1435 = vst [vmem:[%s1434] sm:$0xff] %v1426
        %1436 = vst [vmem:[%s1434 + $0x8] sm:$0xff] %v1431
        %s1437 = scalar_lea.vmem [#allocation2], 5
        %v1438 = vld [vmem:[%s1437] ss:$8 sm:$0xf]
        %v1439 = vld [vmem:[%s1437] ss:$8 sm:$0xf0]
        %v1440 = vor.u32 %v1438, %v1439
        %s1441 = scalar_lea.vmem [#allocation2], 69
        %v1442 = vld [vmem:[%s1441] ss:$8 sm:$0xf]
        %v1443 = vld [vmem:[%s1441] ss:$8 sm:$0xf0]
        %v1444 = vor.u32 %v1442, %v1443
        %s1445 = scalar_lea.vmem %s237, 80 [#allocation8]
        %v1446 = vld [vmem:[%s1445] sm:$0xff]
        %v1447 = vld [vmem:[%s1445 + $0x8] sm:$0xff]
        %v1449 = vsel %vm273, %v1440, 0
        %v1452 = vsel %vm273, %v1444, 0
        %1454 = vmatprep.subr.mxu0 0.0
        %1455 = vmatpush1.msra.mxu0 %v1446
        %1456 = vmatprep.subr.mxu0 0.0
        %1457 = vmatpush1.msra.mxu0 %v1447
        %1458 = vmatprep.subr.mxu0 0.0
        %1459 = vmatpush1.msra.mxu0 0.0
        %1460 = vmatprep.subr.mxu0 0.0
        %1461 = vmatpush1.msra.mxu0 0.0
        %1462 = vmatprep.subr.mxu0 0.0
        %1463 = vmatpush1.msra.mxu0 0.0
        %1464 = vmatprep.subr.mxu0 0.0
        %1465 = vmatpush1.msra.mxu0 0.0
        %1466 = vmatprep.subr.mxu0 0.0
        %1467 = vmatpush1.msra.mxu0 0.0
        %1468 = vmatprep.subr.mxu0 0.0
        %1469 = vmatpush1.msra.mxu0 0.0
        %1470 = vmatprep.subr.mxu0 0.0
        %1471 = vmatpush1.msra.mxu0 0.0
        %1472 = vmatprep.subr.mxu0 0.0
        %1473 = vmatpush1.msra.mxu0 0.0
        %1474 = vmatprep.subr.mxu0 0.0
        %1475 = vmatpush1.msra.mxu0 0.0
        %1476 = vmatprep.subr.mxu0 0.0
        %1477 = vmatpush1.msra.mxu0 0.0
        %1478 = vmatprep.subr.mxu0 0.0
        %1479 = vmatpush1.msra.mxu0 0.0
        %1480 = vmatprep.subr.mxu0 0.0
        %1481 = vmatpush1.msra.mxu0 0.0
        %1482 = vmatprep.subr.mxu0 0.0
        %1483 = vmatpush1.msra.mxu0 0.0
        %1484 = vmatprep.subr.mxu0 0.0
        %1485 = vmatpush1.msra.mxu0 0.0
        %1486 = vmatprep.subr.mxu0 0.0
        %1487 = vmatpush1.msra.mxu0 0.0
        %1488 = vmatprep.subr.mxu0 0.0
        %1489 = vmatpush1.msra.mxu0 0.0
        %1490 = vmatprep.subr.mxu0 0.0
        %1491 = vmatpush1.msra.mxu0 0.0
        %1492 = vmatprep.subr.mxu0 0.0
        %1493 = vmatpush1.msra.mxu0 0.0
        %1494 = vmatprep.subr.mxu0 0.0
        %1495 = vmatpush1.msra.mxu0 0.0
        %1496 = vmatprep.subr.mxu0 0.0
        %1497 = vmatpush1.msra.mxu0 0.0
        %1498 = vmatprep.subr.mxu0 0.0
        %1499 = vmatpush1.msra.mxu0 0.0
        %1500 = vmatprep.subr.mxu0 0.0
        %1501 = vmatpush1.msra.mxu0 0.0
        %1502 = vmatprep.subr.mxu0 0.0
        %1503 = vmatpush1.msra.mxu0 0.0
        %1504 = vmatprep.subr.mxu0 0.0
        %1505 = vmatpush1.msra.mxu0 0.0
        %1506 = vmatprep.subr.mxu0 0.0
        %1507 = vmatpush1.msra.mxu0 0.0
        %1508 = vmatprep.subr.mxu0 0.0
        %1509 = vmatpush1.msra.mxu0 0.0
        %1510 = vmatprep.subr.mxu0 0.0
        %1511 = vmatpush1.msra.mxu0 0.0
        %1512 = vmatprep.subr.mxu0 0.0
        %1513 = vmatpush1.msra.mxu0 0.0
        %1514 = vmatprep.subr.mxu0 0.0
        %1515 = vmatpush1.msra.mxu0 0.0
        %1516 = vmatprep.subr.mxu0 0.0
        %1517 = vmatpush1.msra.mxu0 0.0
        %1518 = vmatprep.mubr.f32.mxu0 0.0
        %1519 = vmatmul.mubr.f32.gmra.mrb[0].mxu0 %v1449
        %v1520 = vpop.f32.mrb[0].mxu0
        %v1521 = vadd.f32 0.0, %v1520
        %v1522 = vpop.f32.mrb[0].mxu0
        %1523 = vmatprep.mubr.f32.mxu0 0.0
        %1524 = vmatmul.mubr.f32.gmra.mrb[0].mxu0 %v1452
        %v1525 = vpop.f32.mrb[0].mxu0
        %v1526 = vadd.f32 0.0, %v1525
        %v1527 = vpop.f32.mrb[0].mxu0
        %1528 = vdwg.mxu0
        %s1529 = scalar_lea.vmem %s264, 80 [#allocation9]
        %1530 = vst [vmem:[%s1529] sm:$0xff] %v1521
        %1531 = vst [vmem:[%s1529 + $0x8] sm:$0xff] %v1526
        %s1532 = scalar_lea.vmem [#allocation2], 6
        %v1533 = vld [vmem:[%s1532] ss:$8 sm:$0xf]
        %v1534 = vld [vmem:[%s1532] ss:$8 sm:$0xf0]
        %v1535 = vor.u32 %v1533, %v1534
        %s1536 = scalar_lea.vmem [#allocation2], 70
        %v1537 = vld [vmem:[%s1536] ss:$8 sm:$0xf]
        %v1538 = vld [vmem:[%s1536] ss:$8 sm:$0xf0]
        %v1539 = vor.u32 %v1537, %v1538
        %s1540 = scalar_lea.vmem %s237, 96 [#allocation8]
        %v1541 = vld [vmem:[%s1540] sm:$0xff]
        %v1542 = vld [vmem:[%s1540 + $0x8] sm:$0xff]
        %v1544 = vsel %vm273, %v1535, 0
        %v1547 = vsel %vm273, %v1539, 0
        %1549 = vmatprep.subr.mxu0 0.0
        %1550 = vmatpush1.msra.mxu0 %v1541
        %1551 = vmatprep.subr.mxu0 0.0
        %1552 = vmatpush1.msra.mxu0 %v1542
        %1553 = vmatprep.subr.mxu0 0.0
        %1554 = vmatpush1.msra.mxu0 0.0
        %1555 = vmatprep.subr.mxu0 0.0
        %1556 = vmatpush1.msra.mxu0 0.0
        %1557 = vmatprep.subr.mxu0 0.0
        %1558 = vmatpush1.msra.mxu0 0.0
        %1559 = vmatprep.subr.mxu0 0.0
        %1560 = vmatpush1.msra.mxu0 0.0
        %1561 = vmatprep.subr.mxu0 0.0
        %1562 = vmatpush1.msra.mxu0 0.0
        %1563 = vmatprep.subr.mxu0 0.0
        %1564 = vmatpush1.msra.mxu0 0.0
        %1565 = vmatprep.subr.mxu0 0.0
        %1566 = vmatpush1.msra.mxu0 0.0
        %1567 = vmatprep.subr.mxu0 0.0
        %1568 = vmatpush1.msra.mxu0 0.0
        %1569 = vmatprep.subr.mxu0 0.0
        %1570 = vmatpush1.msra.mxu0 0.0
        %1571 = vmatprep.subr.mxu0 0.0
        %1572 = vmatpush1.msra.mxu0 0.0
        %1573 = vmatprep.subr.mxu0 0.0
        %1574 = vmatpush1.msra.mxu0 0.0
        %1575 = vmatprep.subr.mxu0 0.0
        %1576 = vmatpush1.msra.mxu0 0.0
        %1577 = vmatprep.subr.mxu0 0.0
        %1578 = vmatpush1.msra.mxu0 0.0
        %1579 = vmatprep.subr.mxu0 0.0
        %1580 = vmatpush1.msra.mxu0 0.0
        %1581 = vmatprep.subr.mxu0 0.0
        %1582 = vmatpush1.msra.mxu0 0.0
        %1583 = vmatprep.subr.mxu0 0.0
        %1584 = vmatpush1.msra.mxu0 0.0
        %1585 = vmatprep.subr.mxu0 0.0
        %1586 = vmatpush1.msra.mxu0 0.0
        %1587 = vmatprep.subr.mxu0 0.0
        %1588 = vmatpush1.msra.mxu0 0.0
        %1589 = vmatprep.subr.mxu0 0.0
        %1590 = vmatpush1.msra.mxu0 0.0
        %1591 = vmatprep.subr.mxu0 0.0
        %1592 = vmatpush1.msra.mxu0 0.0
        %1593 = vmatprep.subr.mxu0 0.0
        %1594 = vmatpush1.msra.mxu0 0.0
        %1595 = vmatprep.subr.mxu0 0.0
        %1596 = vmatpush1.msra.mxu0 0.0
        %1597 = vmatprep.subr.mxu0 0.0
        %1598 = vmatpush1.msra.mxu0 0.0
        %1599 = vmatprep.subr.mxu0 0.0
        %1600 = vmatpush1.msra.mxu0 0.0
        %1601 = vmatprep.subr.mxu0 0.0
        %1602 = vmatpush1.msra.mxu0 0.0
        %1603 = vmatprep.subr.mxu0 0.0
        %1604 = vmatpush1.msra.mxu0 0.0
        %1605 = vmatprep.subr.mxu0 0.0
        %1606 = vmatpush1.msra.mxu0 0.0
        %1607 = vmatprep.subr.mxu0 0.0
        %1608 = vmatpush1.msra.mxu0 0.0
        %1609 = vmatprep.subr.mxu0 0.0
        %1610 = vmatpush1.msra.mxu0 0.0
        %1611 = vmatprep.subr.mxu0 0.0
        %1612 = vmatpush1.msra.mxu0 0.0
        %1613 = vmatprep.mubr.f32.mxu0 0.0
        %1614 = vmatmul.mubr.f32.gmra.mrb[0].mxu0 %v1544
        %v1615 = vpop.f32.mrb[0].mxu0
        %v1616 = vadd.f32 0.0, %v1615
        %v1617 = vpop.f32.mrb[0].mxu0
        %1618 = vmatprep.mubr.f32.mxu0 0.0
        %1619 = vmatmul.mubr.f32.gmra.mrb[0].mxu0 %v1547
        %v1620 = vpop.f32.mrb[0].mxu0
        %v1621 = vadd.f32 0.0, %v1620
        %v1622 = vpop.f32.mrb[0].mxu0
        %1623 = vdwg.mxu0
        %s1624 = scalar_lea.vmem %s264, 96 [#allocation9]
        %1625 = vst [vmem:[%s1624] sm:$0xff] %v1616
        %1626 = vst [vmem:[%s1624 + $0x8] sm:$0xff] %v1621
        %s1627 = scalar_lea.vmem [#allocation2], 7
        %v1628 = vld [vmem:[%s1627] ss:$8 sm:$0xf]
        %v1629 = vld [vmem:[%s1627] ss:$8 sm:$0xf0]
        %v1630 = vor.u32 %v1628, %v1629
        %s1631 = scalar_lea.vmem [#allocation2], 71
        %v1632 = vld [vmem:[%s1631] ss:$8 sm:$0xf]
        %v1633 = vld [vmem:[%s1631] ss:$8 sm:$0xf0]
        %v1634 = vor.u32 %v1632, %v1633
        %s1635 = scalar_lea.vmem %s237, 112 [#allocation8]
        %v1636 = vld [vmem:[%s1635] sm:$0xff]
        %v1637 = vld [vmem:[%s1635 + $0x8] sm:$0xff]
        %v1639 = vsel %vm273, %v1630, 0
        %v1642 = vsel %vm273, %v1634, 0
        %1644 = vmatprep.subr.mxu0 0.0
        %1645 = vmatpush1.msra.mxu0 %v1636
        %1646 = vmatprep.subr.mxu0 0.0
        %1647 = vmatpush1.msra.mxu0 %v1637
        %1648 = vmatprep.subr.mxu0 0.0
        %1649 = vmatpush1.msra.mxu0 0.0
        %1650 = vmatprep.subr.mxu0 0.0
        %1651 = vmatpush1.msra.mxu0 0.0
        %1652 = vmatprep.subr.mxu0 0.0
        %1653 = vmatpush1.msra.mxu0 0.0
        %1654 = vmatprep.subr.mxu0 0.0
        %1655 = vmatpush1.msra.mxu0 0.0
        %1656 = vmatprep.subr.mxu0 0.0
        %1657 = vmatpush1.msra.mxu0 0.0
        %1658 = vmatprep.subr.mxu0 0.0
        %1659 = vmatpush1.msra.mxu0 0.0
        %1660 = vmatprep.subr.mxu0 0.0
        %1661 = vmatpush1.msra.mxu0 0.0
        %1662 = vmatprep.subr.mxu0 0.0
        %1663 = vmatpush1.msra.mxu0 0.0
        %1664 = vmatprep.subr.mxu0 0.0
        %1665 = vmatpush1.msra.mxu0 0.0
        %1666 = vmatprep.subr.mxu0 0.0
        %1667 = vmatpush1.msra.mxu0 0.0
        %1668 = vmatprep.subr.mxu0 0.0
        %1669 = vmatpush1.msra.mxu0 0.0
        %1670 = vmatprep.subr.mxu0 0.0
        %1671 = vmatpush1.msra.mxu0 0.0
        %1672 = vmatprep.subr.mxu0 0.0
        %1673 = vmatpush1.msra.mxu0 0.0
        %1674 = vmatprep.subr.mxu0 0.0
        %1675 = vmatpush1.msra.mxu0 0.0
        %1676 = vmatprep.subr.mxu0 0.0
        %1677 = vmatpush1.msra.mxu0 0.0
        %1678 = vmatprep.subr.mxu0 0.0
        %1679 = vmatpush1.msra.mxu0 0.0
        %1680 = vmatprep.subr.mxu0 0.0
        %1681 = vmatpush1.msra.mxu0 0.0
        %1682 = vmatprep.subr.mxu0 0.0
        %1683 = vmatpush1.msra.mxu0 0.0
        %1684 = vmatprep.subr.mxu0 0.0
        %1685 = vmatpush1.msra.mxu0 0.0
        %1686 = vmatprep.subr.mxu0 0.0
        %1687 = vmatpush1.msra.mxu0 0.0
        %1688 = vmatprep.subr.mxu0 0.0
        %1689 = vmatpush1.msra.mxu0 0.0
        %1690 = vmatprep.subr.mxu0 0.0
        %1691 = vmatpush1.msra.mxu0 0.0
        %1692 = vmatprep.subr.mxu0 0.0
        %1693 = vmatpush1.msra.mxu0 0.0
        %1694 = vmatprep.subr.mxu0 0.0
        %1695 = vmatpush1.msra.mxu0 0.0
        %1696 = vmatprep.subr.mxu0 0.0
        %1697 = vmatpush1.msra.mxu0 0.0
        %1698 = vmatprep.subr.mxu0 0.0
        %1699 = vmatpush1.msra.mxu0 0.0
        %1700 = vmatprep.subr.mxu0 0.0
        %1701 = vmatpush1.msra.mxu0 0.0
        %1702 = vmatprep.subr.mxu0 0.0
        %1703 = vmatpush1.msra.mxu0 0.0
        %1704 = vmatprep.subr.mxu0 0.0
        %1705 = vmatpush1.msra.mxu0 0.0
        %1706 = vmatprep.subr.mxu0 0.0
        %1707 = vmatpush1.msra.mxu0 0.0
        %1708 = vmatprep.mubr.f32.mxu0 0.0
        %1709 = vmatmul.mubr.f32.gmra.mrb[0].mxu0 %v1639
        %v1710 = vpop.f32.mrb[0].mxu0
        %v1711 = vadd.f32 0.0, %v1710
        %v1712 = vpop.f32.mrb[0].mxu0
        %1713 = vmatprep.mubr.f32.mxu0 0.0
        %1714 = vmatmul.mubr.f32.gmra.mrb[0].mxu0 %v1642
        %v1715 = vpop.f32.mrb[0].mxu0
        %v1716 = vadd.f32 0.0, %v1715
        %v1717 = vpop.f32.mrb[0].mxu0
        %1718 = vdwg.mxu0
        %s1719 = scalar_lea.vmem %s264, 112 [#allocation9]
        %1720 = vst [vmem:[%s1719] sm:$0xff] %v1711
        %1721 = vst [vmem:[%s1719 + $0x8] sm:$0xff] %v1716
        %s1722 = sand.u32 %s121, 1
        %s1723 = scalar_lea.sflag [#allocation5], %s1722
        %s1724 = sand.u32 %s121, 1
        %s1725 = smul.addr %s1724, 128
        %s1726 = scalar_lea.vmem [#allocation9], %s1725
        // Predicated region
        $region45: #{tpu_custom_call.1} parent=31 // pred_check
          %p1727 = pneg %p131
        $region46: #{tpu_custom_call.1} parent=31 // pred_check_branch
          %1729 = sbr.rel (%p1727) target = $region48
        $region47: #{tpu_custom_call.1} parent=31 // pred_region
          %s1730 = smul.u32 8, %s26
          %s1731 = smul.u32 2, %s25
          %s1733 = ssub.s32 2048, 2048
          %1734 = vsyncadd %s1723, %s1733
          %s1735 = smul.addr %s1730, 2
          %s1736 = sadd.s32 %s1731, %s1735
          %s1737 = smul.addr %s1736, 128
          %s1738 = scalar_lea.hbm %s3, %s1737
          %s1739 = sshll.u32 %s1726, 4
          %s1740 = int_to_ptr.vmem [resolvable:$true] %s1739
          %1745 = dma.vmem_to_hbm [thread:$0]  %s1740, 2048, %s1738, %s1723, 128, 128, 8
        $region48: #{tpu_custom_call.1} parent=31 // pred_fallthru
          _
      $region32: #{tpu_custom_call.1} parent=5 // pred_fallthru
        _
      %p1746 = scmp.le.s32.totalorder 2, %s16
      // Predicated region
      $region49: #{tpu_custom_call.1} parent=5 // pred_check
        %p1747 = pneg %p1746
      $region50: #{tpu_custom_call.1} parent=5 // pred_check_branch
        %1749 = sbr.rel (%p1747) target = $region52
      $region51: #{tpu_custom_call.1} parent=5 // pred_region
        %s1750 = ssub.s32 %s16, 2
        // Predicated region
        $region53: #{tpu_custom_call.1} parent=51 // pred_check
          %p1751 = pneg %p137
        $region54: #{tpu_custom_call.1} parent=51 // pred_check_branch
          %1753 = sbr.rel (%p1751) target = $region56
        $region55: #{tpu_custom_call.1} parent=51 // pred_region
          %s1754 = sand.u32 %s122, 1
          %s1755 = scalar_lea.sflag [#allocation5], %s1754
          %s1756 = sand.u32 %s122, 1
          %s1757 = smul.addr %s1756, 128
          %s1758 = scalar_lea.vmem [#allocation9], %s1757
          %1759 = dma.done %s1755, 2048
        $region56: #{tpu_custom_call.1} parent=51 // pred_fallthru
          _
      $region52: #{tpu_custom_call.1} parent=5 // pred_fallthru
        _
    $region6: #{tpu_custom_call.1} parent=1 // loop_footer
      %s20 = sadd.s32 1, %s16
    $region7: #{tpu_custom_call.1} parent=1 // loop_footer_branch
      %15 = sbr.rel target = $region3
    $region8: #{tpu_custom_call.1} parent=1 // loop_exit
      _
    %1760 = vsyncpa [#allocation4], 1
    %s1761 = scalar_lea.sflag [#allocation4], 1
    %1762 = vsyncpa %s1761, 1
    %1763 = vsyncpa [#allocation7], 1
    %s1764 = scalar_lea.sflag [#allocation7], 1
    %1765 = vsyncpa %s1764, 1
    %1766 = vsyncpa [#allocation5], 1
    %s1767 = scalar_lea.sflag [#allocation5], 1
    %1768 = vsyncpa %s1767, 1

</llo_original>
